<compile_context>
chip_gen: v7x
topology: tpu7x:2x2x1
jax: 0.10.0
libtpu: 0.0.40
codegen_flags: <defaults>
</compile_context>

<pallas_src>
import functools

import jax
import jax.numpy as jnp
import numpy as np
from jax.experimental import pallas as pl
from jax.experimental.pallas import tpu as pltpu

EPS = 1e-6  # LayerNorm2d eps in NAFNet / CGNet


# ----------------------------- kernel helpers -----------------------------

def _layernorm_c(x, w, b):
    """LayerNorm2d on (C, HW): normalize over channel (sublane) axis per pixel.

    Fused single pass: biased var = E[x^2] - mu^2 (the two means are
    independent reductions, so they overlap on the XLU)."""
    mu = jnp.mean(x, axis=0, keepdims=True)            # (1, HW)
    ex2 = jnp.mean(x * x, axis=0, keepdims=True)       # (1, HW)
    var = ex2 - mu * mu
    inv = jax.lax.rsqrt(var + EPS)
    return (x - mu) * inv * w + b                      # w, b: (C, 1)


def _pointwise(x, w, b):
    """1x1 conv as unrolled broadcast-FMA on the VPU.

    x: (Cin, HW); w: (Cout, Cin); b: (Cout, 1) -> (Cout, HW).
    K = Cin is far too small here to feed the MXU; for production C >= 128
    replace with jnp.dot(..., preferred_element_type=jnp.float32)."""
    acc = w[:, 0:1] * x[0:1, :]
    for k in range(1, w.shape[1]):
        acc = acc + w[:, k:k + 1] * x[k:k + 1, :]
    return acc + b


def _dwconv3x3(x, taps, b, masks, W):
    """3x3 depthwise conv (padding=1) on the flattened (C, H*W) layout.

    x: (C, HW); taps: (C, 9); b: (C, 1); masks: (9, HW) float {0,1}.
    Each spatial tap is a lane rotation by di*W+dj (XLU) gated by a
    precomputed boundary mask — no padded copy, no unaligned slices."""
    HW = x.shape[1]
    acc = None
    k = 0
    for di in (-1, 0, 1):
        for dj in (-1, 0, 1):
            s = di * W + dj
            if s == 0:
                shifted = x
            else:
                shifted = pltpu.roll(x, (-s) % HW, axis=1)   # shifted[p] = x[p+s]
                shifted = shifted * masks[k:k + 1, :]         # zero OOB taps
            term = shifted * taps[:, k:k + 1]
            acc = term if acc is None else acc + term
            k += 1
    return acc + b


# --------------------------------- kernel ---------------------------------

def nafblock_kernel(x_ref, mats_ref, vecs_ref, dw_ref, mask_ref, o_ref, *, W):
    x_in = x_ref[0].astype(jnp.float32)          # (C, HW), channels on sublanes
    vecs = vecs_ref[...].astype(jnp.float32)     # (C, 15) per-channel params
    masks = mask_ref[...]                        # (9, HW) boundary masks

    (n1w, n1b, b1a, b1b, b2a, b2b, bsca, b3, beta,
     n2w, n2b, b4a, b4b, b5, gamma) = [vecs[:, i:i + 1] for i in range(15)]

    w1a, w1b = mats_ref[0], mats_ref[1]          # conv1 halves (Cout, Cin)
    wsca, w3 = mats_ref[2], mats_ref[3]
    w4a, w4b = mats_ref[4], mats_ref[5]
    w5 = mats_ref[6]

    # ---- norm1 -> conv1 (C->2C, split halves) -> 3x3 depthwise -> SimpleGate
    x = _layernorm_c(x_in, n1w, n1b)
    t1 = _dwconv3x3(_pointwise(x, w1a, b1a), dw_ref[0], b2a, masks, W)
    t2 = _dwconv3x3(_pointwise(x, w1b, b1b), dw_ref[1], b2b, masks, W)
    g = t1 * t2                                  # SimpleGate: x1 * x2

    # ---- SCA: global avg pool (lane reduction) + 1x1 conv channel scale ----
    s = jnp.mean(g, axis=1, keepdims=True)       # (C, 1)
    s = _pointwise(s, wsca, bsca)                # (C, 1)
    g = g * s

    # ---- conv3 (C->C) + residual (beta); dropout1 = Identity ----
    x = _pointwise(g, w3, b3)
    y = x_in + x * beta

    # ---- FFN: norm2 -> conv4 -> SimpleGate -> conv5 + residual (gamma) ----
    x = _layernorm_c(y, n2w, n2b)
    f = _pointwise(x, w4a, b4a) * _pointwise(x, w4b, b4b)
    x = _pointwise(f, w5, b5)

    o_ref[0] = (y + x * gamma).astype(o_ref.dtype)


# -------------------------------- wrapper ----------------------------------

def nafblock0_pallas(x_nchw, params):
    """x_nchw: (B, C, H, W) float32, PyTorch layout. Returns NCHW output."""
    B, C, H, W = x_nchw.shape
    HW = H * W
    x = x_nchw.reshape(B, C, HW)                 # NCHW -> (B, C, HW), no transpose

    def T(a):                                    # (Cin, Cout) -> (Cout, Cin)
        return jnp.transpose(a)

    w1, w4 = params["w1"], params["w4"]
    mats = jnp.stack([
        T(w1[:, :C]), T(w1[:, C:]),              # conv1 halves
        T(params["wsca"]), T(params["w3"]),
        T(w4[:, :C]), T(w4[:, C:]),              # conv4 halves
        T(params["w5"]),
    ], axis=0).astype(jnp.float32)               # (7, C, C)

    vecs = jnp.stack([
        params["n1w"][0], params["n1b"][0],
        params["b1"][0, :C], params["b1"][0, C:],
        params["b2"][0, :C], params["b2"][0, C:],
        params["bsca"][0], params["b3"][0],
        params["beta"][0],
        params["n2w"][0], params["n2b"][0],
        params["b4"][0, :C], params["b4"][0, C:],
        params["b5"][0], params["gamma"][0],
    ], axis=1).astype(jnp.float32)               # (C, 15)

    w2 = params["w2"]                            # (3, 3, 2C)
    dwa = jnp.transpose(w2[:, :, :C], (2, 0, 1)).reshape(C, 9)
    dwb = jnp.transpose(w2[:, :, C:], (2, 0, 1)).reshape(C, 9)
    dwt = jnp.stack([dwa, dwb], axis=0).astype(jnp.float32)   # (2, C, 9)

    # Precomputed {0,1} boundary masks for the 9 depthwise taps (static H, W).
    hi = np.arange(HW) // W
    wi = np.arange(HW) % W
    m = np.zeros((9, HW), dtype=np.float32)
    k = 0
    for di in (-1, 0, 1):
        for dj in (-1, 0, 1):
            valid = ((hi + di >= 0) & (hi + di < H)
                     & (wi + dj >= 0) & (wi + dj < W))
            m[k] = valid.astype(np.float32)
            k += 1
    masks = jnp.asarray(m)                       # (9, HW)

    kernel = functools.partial(nafblock_kernel, W=W)

    out = pl.pallas_call(
        kernel,
        out_shape=jax.ShapeDtypeStruct((B, C, HW), x_nchw.dtype),
        grid_spec=pltpu.PrefetchScalarGridSpec(
            num_scalar_prefetch=0,
            grid=(B,),
            in_specs=[
                pl.BlockSpec((1, C, HW), lambda b: (b, 0, 0)),     # image b
                pl.BlockSpec(mats.shape, lambda b: (0, 0, 0)),     # grid-invariant
                pl.BlockSpec(vecs.shape, lambda b: (0, 0)),
                pl.BlockSpec(dwt.shape, lambda b: (0, 0, 0)),
                pl.BlockSpec(masks.shape, lambda b: (0, 0)),
            ],
            out_specs=pl.BlockSpec((1, C, HW), lambda b: (b, 0, 0)),
        ),
        compiler_params=pltpu.CompilerParams(
            dimension_semantics=("parallel",)),
    )(x, mats, vecs, dwt, masks)
    return out.reshape(B, C, H, W)


# ------------------------- pure-JAX reference (NHWC) ------------------------

def nafblock0_ref(inp, p):
    B, H, W, C = inp.shape

    def ln(x, w, b):
        mu = jnp.mean(x, axis=-1, keepdims=True)
        var = jnp.mean((x - mu) ** 2, axis=-1, keepdims=True)
        return (x - mu) / jnp.sqrt(var + EPS) * w + b

    x = ln(inp, p["n1w"][0], p["n1b"][0])
    x = jnp.einsum("bhwc,cd->bhwd", x, p["w1"]) + p["b1"][0]
    xp = jnp.pad(x, ((0, 0), (1, 1), (1, 1), (0, 0)))
    acc = jnp.zeros_like(x)
    for di in range(3):
        for dj in range(3):
            acc = acc + xp[:, di:di + H, dj:dj + W, :] * p["w2"][di, dj]
    x = acc + p["b2"][0]
    x = x[..., :C] * x[..., C:]
    s = jnp.mean(x, axis=(1, 2))
    s = s @ p["wsca"] + p["bsca"][0]
    x = x * s[:, None, None, :]
    x = jnp.einsum("bhwc,cd->bhwd", x, p["w3"]) + p["b3"][0]
    y = inp + x * p["beta"][0]
    x = ln(y, p["n2w"][0], p["n2b"][0])
    x = jnp.einsum("bhwc,cd->bhwd", x, p["w4"]) + p["b4"][0]
    x = x[..., :C] * x[..., C:]
    x = jnp.einsum("bhwc,cd->bhwd", x, p["w5"]) + p["b5"][0]
    return y + x * p["gamma"][0]


def make_params(key, c):
    dw = 2 * c
    ks = jax.random.split(key, 18)

    def rnd(k, shape, scale=0.1):
        return (scale * jax.random.normal(k, shape)).astype(jnp.float32)

    # NOTE: the PyTorch module initializes beta/gamma to zeros and norm weights
    # to ones; here everything gets deterministic random values so the full
    # compute path is exercised.
    return {
        "n1w": rnd(ks[0], (1, c)) + 1.0,
        "n1b": rnd(ks[1], (1, c)),
        "w1": rnd(ks[2], (c, dw)),
        "b1": rnd(ks[3], (1, dw)),
        "w2": rnd(ks[4], (3, 3, dw)),
        "b2": rnd(ks[5], (1, dw)),
        "wsca": rnd(ks[6], (c, c)),
        "bsca": rnd(ks[7], (1, c)),
        "w3": rnd(ks[8], (c, c)),
        "b3": rnd(ks[9], (1, c)),
        "beta": rnd(ks[10], (1, c), 0.5),
        "n2w": rnd(ks[11], (1, c)) + 1.0,
        "n2b": rnd(ks[12], (1, c)),
        "w4": rnd(ks[13], (c, dw)),
        "b4": rnd(ks[14], (1, dw)),
        "w5": rnd(ks[15], (c, c)),
        "b5": rnd(ks[16], (1, c)),
        "gamma": rnd(ks[17], (1, c), 0.5),
    }


if __name__ == "__main__":
    B, C, H, W = 2, 8, 16, 16
    key = jax.random.PRNGKey(0)
    k_x, k_p = jax.random.split(key)

    x_nchw = jax.random.normal(k_x, (B, C, H, W), dtype=jnp.float32)
    params = make_params(k_p, C)

    out_nchw = nafblock0_pallas(x_nchw, params)
    out_nchw = jax.block_until_ready(out_nchw)
    assert out_nchw.shape == (B, C, H, W)

    # Validate against a pure-JAX NHWC reference.
    x_nhwc = jnp.transpose(x_nchw, (0, 2, 3, 1))
    ref_nchw = jnp.transpose(nafblock0_ref(x_nhwc, params), (0, 3, 1, 2))
    np.testing.assert_allclose(np.asarray(out_nchw), np.asarray(ref_nchw),
                               rtol=1e-4, atol=1e-4)

    print("KERNEL_OK")
</pallas_src>

<mosaic_0001>
module attributes {stable_mosaic.version = 11 : i64} {
  func.func @nafblock_kernel(%arg0: i32, %arg1: memref<1x8x256xf32, #tpu.memory_space<vmem>>, %arg2: memref<7x8x8xf32, #tpu.memory_space<vmem>>, %arg3: memref<8x15xf32, #tpu.memory_space<vmem>>, %arg4: memref<2x8x9xf32, #tpu.memory_space<vmem>>, %arg5: memref<9x256xf32, #tpu.memory_space<vmem>>, %arg6: memref<1x8x256xf32, #tpu.memory_space<vmem>>) attributes {dimension_semantics = [#tpu.dimension_semantics<parallel>], iteration_bounds = array<i64: 2>, scalar_prefetch = 0 : i64, scratch_operands = 0 : i64, tpu.core_type = #tpu.core_type<tc>, window_params = [{transform_indices = @transform_0, window_bounds = array<i64: 1, 8, 256>}, {pipeline_mode = #tpu.pipeline_mode<synchronous>, transform_indices = @transform_1, window_bounds = array<i64: 7, 8, 8>}, {pipeline_mode = #tpu.pipeline_mode<synchronous>, transform_indices = @transform_2, window_bounds = array<i64: 8, 15>}, {pipeline_mode = #tpu.pipeline_mode<synchronous>, transform_indices = @transform_3, window_bounds = array<i64: 2, 8, 9>}, {pipeline_mode = #tpu.pipeline_mode<synchronous>, transform_indices = @transform_4, window_bounds = array<i64: 9, 256>}, {transform_indices = @transform_5, window_bounds = array<i64: 1, 8, 256>}]} {
    %c0 = arith.constant 0 : index
    %c0_0 = arith.constant 0 : index
    %c0_1 = arith.constant 0 : index
    %0 = vector.load %arg1[%c0, %c0_0, %c0_1] : memref<1x8x256xf32, #tpu.memory_space<vmem>>, vector<1x8x256xf32>
    %1 = vector.shape_cast %0 : vector<1x8x256xf32> to vector<8x256xf32>
    %c0_2 = arith.constant 0 : index
    %c0_3 = arith.constant 0 : index
    %2 = vector.load %arg3[%c0_2, %c0_3] : memref<8x15xf32, #tpu.memory_space<vmem>>, vector<8x15xf32>
    %c0_4 = arith.constant 0 : index
    %c0_5 = arith.constant 0 : index
    %3 = vector.load %arg5[%c0_4, %c0_5] : memref<9x256xf32, #tpu.memory_space<vmem>>, vector<9x256xf32>
    %4 = vector.extract_strided_slice %2 {offsets = [0, 0], sizes = [8, 1], strides = [1, 1]} : vector<8x15xf32> to vector<8x1xf32>
    %5 = vector.extract_strided_slice %2 {offsets = [0, 1], sizes = [8, 1], strides = [1, 1]} : vector<8x15xf32> to vector<8x1xf32>
    %6 = vector.extract_strided_slice %2 {offsets = [0, 2], sizes = [8, 1], strides = [1, 1]} : vector<8x15xf32> to vector<8x1xf32>
    %7 = vector.extract_strided_slice %2 {offsets = [0, 3], sizes = [8, 1], strides = [1, 1]} : vector<8x15xf32> to vector<8x1xf32>
    %8 = vector.extract_strided_slice %2 {offsets = [0, 4], sizes = [8, 1], strides = [1, 1]} : vector<8x15xf32> to vector<8x1xf32>
    %9 = vector.extract_strided_slice %2 {offsets = [0, 5], sizes = [8, 1], strides = [1, 1]} : vector<8x15xf32> to vector<8x1xf32>
    %10 = vector.extract_strided_slice %2 {offsets = [0, 6], sizes = [8, 1], strides = [1, 1]} : vector<8x15xf32> to vector<8x1xf32>
    %11 = vector.extract_strided_slice %2 {offsets = [0, 7], sizes = [8, 1], strides = [1, 1]} : vector<8x15xf32> to vector<8x1xf32>
    %12 = vector.extract_strided_slice %2 {offsets = [0, 8], sizes = [8, 1], strides = [1, 1]} : vector<8x15xf32> to vector<8x1xf32>
    %13 = vector.extract_strided_slice %2 {offsets = [0, 9], sizes = [8, 1], strides = [1, 1]} : vector<8x15xf32> to vector<8x1xf32>
    %14 = vector.extract_strided_slice %2 {offsets = [0, 10], sizes = [8, 1], strides = [1, 1]} : vector<8x15xf32> to vector<8x1xf32>
    %15 = vector.extract_strided_slice %2 {offsets = [0, 11], sizes = [8, 1], strides = [1, 1]} : vector<8x15xf32> to vector<8x1xf32>
    %16 = vector.extract_strided_slice %2 {offsets = [0, 12], sizes = [8, 1], strides = [1, 1]} : vector<8x15xf32> to vector<8x1xf32>
    %17 = vector.extract_strided_slice %2 {offsets = [0, 13], sizes = [8, 1], strides = [1, 1]} : vector<8x15xf32> to vector<8x1xf32>
    %18 = vector.extract_strided_slice %2 {offsets = [0, 14], sizes = [8, 1], strides = [1, 1]} : vector<8x15xf32> to vector<8x1xf32>
    %c0_6 = arith.constant 0 : index
    %c0_7 = arith.constant 0 : index
    %c0_8 = arith.constant 0 : index
    %19 = vector.load %arg2[%c0_6, %c0_7, %c0_8] : memref<7x8x8xf32, #tpu.memory_space<vmem>>, vector<1x8x8xf32>
    %20 = vector.shape_cast %19 : vector<1x8x8xf32> to vector<8x8xf32>
    %c1 = arith.constant 1 : index
    %c0_9 = arith.constant 0 : index
    %c0_10 = arith.constant 0 : index
    %21 = vector.load %arg2[%c1, %c0_9, %c0_10] : memref<7x8x8xf32, #tpu.memory_space<vmem>>, vector<1x8x8xf32>
    %22 = vector.shape_cast %21 : vector<1x8x8xf32> to vector<8x8xf32>
    %c2 = arith.constant 2 : index
    %c0_11 = arith.constant 0 : index
    %c0_12 = arith.constant 0 : index
    %23 = vector.load %arg2[%c2, %c0_11, %c0_12] : memref<7x8x8xf32, #tpu.memory_space<vmem>>, vector<1x8x8xf32>
    %24 = vector.shape_cast %23 : vector<1x8x8xf32> to vector<8x8xf32>
    %c3 = arith.constant 3 : index
    %c0_13 = arith.constant 0 : index
    %c0_14 = arith.constant 0 : index
    %25 = vector.load %arg2[%c3, %c0_13, %c0_14] : memref<7x8x8xf32, #tpu.memory_space<vmem>>, vector<1x8x8xf32>
    %26 = vector.shape_cast %25 : vector<1x8x8xf32> to vector<8x8xf32>
    %c4 = arith.constant 4 : index
    %c0_15 = arith.constant 0 : index
    %c0_16 = arith.constant 0 : index
    %27 = vector.load %arg2[%c4, %c0_15, %c0_16] : memref<7x8x8xf32, #tpu.memory_space<vmem>>, vector<1x8x8xf32>
    %28 = vector.shape_cast %27 : vector<1x8x8xf32> to vector<8x8xf32>
    %c5 = arith.constant 5 : index
    %c0_17 = arith.constant 0 : index
    %c0_18 = arith.constant 0 : index
    %29 = vector.load %arg2[%c5, %c0_17, %c0_18] : memref<7x8x8xf32, #tpu.memory_space<vmem>>, vector<1x8x8xf32>
    %30 = vector.shape_cast %29 : vector<1x8x8xf32> to vector<8x8xf32>
    %c6 = arith.constant 6 : index
    %c0_19 = arith.constant 0 : index
    %c0_20 = arith.constant 0 : index
    %31 = vector.load %arg2[%c6, %c0_19, %c0_20] : memref<7x8x8xf32, #tpu.memory_space<vmem>>, vector<1x8x8xf32>
    %32 = vector.shape_cast %31 : vector<1x8x8xf32> to vector<8x8xf32>
    %cst = arith.constant dense<0.000000e+00> : vector<256xf32>
    %33 = vector.multi_reduction <add>, %1, %cst [0] : vector<8x256xf32> to vector<256xf32>
    %34 = vector.shape_cast %33 : vector<256xf32> to vector<1x256xf32>
    %cst_21 = arith.constant 8.000000e+00 : f32
    %35 = vector.broadcast %cst_21 : f32 to vector<1x256xf32>
    %36 = arith.divf %34, %35 : vector<1x256xf32>
    %37 = arith.mulf %1, %1 : vector<8x256xf32>
    %cst_22 = arith.constant dense<0.000000e+00> : vector<256xf32>
    %38 = vector.multi_reduction <add>, %37, %cst_22 [0] : vector<8x256xf32> to vector<256xf32>
    %39 = vector.shape_cast %38 : vector<256xf32> to vector<1x256xf32>
    %cst_23 = arith.constant 8.000000e+00 : f32
    %40 = vector.broadcast %cst_23 : f32 to vector<1x256xf32>
    %41 = arith.divf %39, %40 : vector<1x256xf32>
    %42 = arith.mulf %36, %36 : vector<1x256xf32>
    %43 = arith.subf %41, %42 : vector<1x256xf32>
    %cst_24 = arith.constant 9.99999997E-7 : f32
    %44 = vector.broadcast %cst_24 : f32 to vector<1x256xf32>
    %45 = arith.addf %43, %44 : vector<1x256xf32>
    %46 = math.rsqrt %45 : vector<1x256xf32>
    %47 = vector.broadcast %36 : vector<1x256xf32> to vector<8x256xf32>
    %48 = arith.subf %1, %47 : vector<8x256xf32>
    %49 = vector.broadcast %46 : vector<1x256xf32> to vector<8x256xf32>
    %50 = arith.mulf %48, %49 : vector<8x256xf32>
    %51 = vector.broadcast %4 : vector<8x1xf32> to vector<8x256xf32>
    %52 = arith.mulf %50, %51 : vector<8x256xf32>
    %53 = vector.broadcast %5 : vector<8x1xf32> to vector<8x256xf32>
    %54 = arith.addf %52, %53 : vector<8x256xf32>
    %55 = vector.extract_strided_slice %20 {offsets = [0, 0], sizes = [8, 1], strides = [1, 1]} : vector<8x8xf32> to vector<8x1xf32>
    %56 = vector.extract_strided_slice %54 {offsets = [0, 0], sizes = [1, 256], strides = [1, 1]} : vector<8x256xf32> to vector<1x256xf32>
    %57 = vector.broadcast %55 : vector<8x1xf32> to vector<8x256xf32>
    %58 = vector.broadcast %56 : vector<1x256xf32> to vector<8x256xf32>
    %59 = arith.mulf %57, %58 : vector<8x256xf32>
    %60 = vector.extract_strided_slice %20 {offsets = [0, 1], sizes = [8, 1], strides = [1, 1]} : vector<8x8xf32> to vector<8x1xf32>
    %61 = vector.extract_strided_slice %54 {offsets = [1, 0], sizes = [1, 256], strides = [1, 1]} : vector<8x256xf32> to vector<1x256xf32>
    %62 = vector.broadcast %60 : vector<8x1xf32> to vector<8x256xf32>
    %63 = vector.broadcast %61 : vector<1x256xf32> to vector<8x256xf32>
    %64 = arith.mulf %62, %63 : vector<8x256xf32>
    %65 = arith.addf %59, %64 : vector<8x256xf32>
    %66 = vector.extract_strided_slice %20 {offsets = [0, 2], sizes = [8, 1], strides = [1, 1]} : vector<8x8xf32> to vector<8x1xf32>
    %67 = vector.extract_strided_slice %54 {offsets = [2, 0], sizes = [1, 256], strides = [1, 1]} : vector<8x256xf32> to vector<1x256xf32>
    %68 = vector.broadcast %66 : vector<8x1xf32> to vector<8x256xf32>
    %69 = vector.broadcast %67 : vector<1x256xf32> to vector<8x256xf32>
    %70 = arith.mulf %68, %69 : vector<8x256xf32>
    %71 = arith.addf %65, %70 : vector<8x256xf32>
    %72 = vector.extract_strided_slice %20 {offsets = [0, 3], sizes = [8, 1], strides = [1, 1]} : vector<8x8xf32> to vector<8x1xf32>
    %73 = vector.extract_strided_slice %54 {offsets = [3, 0], sizes = [1, 256], strides = [1, 1]} : vector<8x256xf32> to vector<1x256xf32>
    %74 = vector.broadcast %72 : vector<8x1xf32> to vector<8x256xf32>
    %75 = vector.broadcast %73 : vector<1x256xf32> to vector<8x256xf32>
    %76 = arith.mulf %74, %75 : vector<8x256xf32>
    %77 = arith.addf %71, %76 : vector<8x256xf32>
    %78 = vector.extract_strided_slice %20 {offsets = [0, 4], sizes = [8, 1], strides = [1, 1]} : vector<8x8xf32> to vector<8x1xf32>
    %79 = vector.extract_strided_slice %54 {offsets = [4, 0], sizes = [1, 256], strides = [1, 1]} : vector<8x256xf32> to vector<1x256xf32>
    %80 = vector.broadcast %78 : vector<8x1xf32> to vector<8x256xf32>
    %81 = vector.broadcast %79 : vector<1x256xf32> to vector<8x256xf32>
    %82 = arith.mulf %80, %81 : vector<8x256xf32>
    %83 = arith.addf %77, %82 : vector<8x256xf32>
    %84 = vector.extract_strided_slice %20 {offsets = [0, 5], sizes = [8, 1], strides = [1, 1]} : vector<8x8xf32> to vector<8x1xf32>
    %85 = vector.extract_strided_slice %54 {offsets = [5, 0], sizes = [1, 256], strides = [1, 1]} : vector<8x256xf32> to vector<1x256xf32>
    %86 = vector.broadcast %84 : vector<8x1xf32> to vector<8x256xf32>
    %87 = vector.broadcast %85 : vector<1x256xf32> to vector<8x256xf32>
    %88 = arith.mulf %86, %87 : vector<8x256xf32>
    %89 = arith.addf %83, %88 : vector<8x256xf32>
    %90 = vector.extract_strided_slice %20 {offsets = [0, 6], sizes = [8, 1], strides = [1, 1]} : vector<8x8xf32> to vector<8x1xf32>
    %91 = vector.extract_strided_slice %54 {offsets = [6, 0], sizes = [1, 256], strides = [1, 1]} : vector<8x256xf32> to vector<1x256xf32>
    %92 = vector.broadcast %90 : vector<8x1xf32> to vector<8x256xf32>
    %93 = vector.broadcast %91 : vector<1x256xf32> to vector<8x256xf32>
    %94 = arith.mulf %92, %93 : vector<8x256xf32>
    %95 = arith.addf %89, %94 : vector<8x256xf32>
    %96 = vector.extract_strided_slice %20 {offsets = [0, 7], sizes = [8, 1], strides = [1, 1]} : vector<8x8xf32> to vector<8x1xf32>
    %97 = vector.extract_strided_slice %54 {offsets = [7, 0], sizes = [1, 256], strides = [1, 1]} : vector<8x256xf32> to vector<1x256xf32>
    %98 = vector.broadcast %96 : vector<8x1xf32> to vector<8x256xf32>
    %99 = vector.broadcast %97 : vector<1x256xf32> to vector<8x256xf32>
    %100 = arith.mulf %98, %99 : vector<8x256xf32>
    %101 = arith.addf %95, %100 : vector<8x256xf32>
    %102 = vector.broadcast %6 : vector<8x1xf32> to vector<8x256xf32>
    %103 = arith.addf %101, %102 : vector<8x256xf32>
    %c0_25 = arith.constant 0 : index
    %c0_26 = arith.constant 0 : index
    %c0_27 = arith.constant 0 : index
    %104 = vector.load %arg4[%c0_25, %c0_26, %c0_27] : memref<2x8x9xf32, #tpu.memory_space<vmem>>, vector<1x8x9xf32>
    %105 = vector.shape_cast %104 : vector<1x8x9xf32> to vector<8x9xf32>
    %c17_i32 = arith.constant 17 : i32
    %106 = tpu.dynamic_rotate %103 by %c17_i32 dim 1 : vector<8x256xf32>, i32 -> vector<8x256xf32>
    %107 = vector.extract_strided_slice %3 {offsets = [0, 0], sizes = [1, 256], strides = [1, 1]} : vector<9x256xf32> to vector<1x256xf32>
    %108 = vector.broadcast %107 : vector<1x256xf32> to vector<8x256xf32>
    %109 = arith.mulf %106, %108 : vector<8x256xf32>
    %110 = vector.extract_strided_slice %105 {offsets = [0, 0], sizes = [8, 1], strides = [1, 1]} : vector<8x9xf32> to vector<8x1xf32>
    %111 = vector.broadcast %110 : vector<8x1xf32> to vector<8x256xf32>
    %112 = arith.mulf %109, %111 : vector<8x256xf32>
    %c16_i32 = arith.constant 16 : i32
    %113 = tpu.dynamic_rotate %103 by %c16_i32 dim 1 : vector<8x256xf32>, i32 -> vector<8x256xf32>
    %114 = vector.extract_strided_slice %3 {offsets = [1, 0], sizes = [1, 256], strides = [1, 1]} : vector<9x256xf32> to vector<1x256xf32>
    %115 = vector.broadcast %114 : vector<1x256xf32> to vector<8x256xf32>
    %116 = arith.mulf %113, %115 : vector<8x256xf32>
    %117 = vector.extract_strided_slice %105 {offsets = [0, 1], sizes = [8, 1], strides = [1, 1]} : vector<8x9xf32> to vector<8x1xf32>
    %118 = vector.broadcast %117 : vector<8x1xf32> to vector<8x256xf32>
    %119 = arith.mulf %116, %118 : vector<8x256xf32>
    %120 = arith.addf %112, %119 : vector<8x256xf32>
    %c15_i32 = arith.constant 15 : i32
    %121 = tpu.dynamic_rotate %103 by %c15_i32 dim 1 : vector<8x256xf32>, i32 -> vector<8x256xf32>
    %122 = vector.extract_strided_slice %3 {offsets = [2, 0], sizes = [1, 256], strides = [1, 1]} : vector<9x256xf32> to vector<1x256xf32>
    %123 = vector.broadcast %122 : vector<1x256xf32> to vector<8x256xf32>
    %124 = arith.mulf %121, %123 : vector<8x256xf32>
    %125 = vector.extract_strided_slice %105 {offsets = [0, 2], sizes = [8, 1], strides = [1, 1]} : vector<8x9xf32> to vector<8x1xf32>
    %126 = vector.broadcast %125 : vector<8x1xf32> to vector<8x256xf32>
    %127 = arith.mulf %124, %126 : vector<8x256xf32>
    %128 = arith.addf %120, %127 : vector<8x256xf32>
    %c1_i32 = arith.constant 1 : i32
    %129 = tpu.dynamic_rotate %103 by %c1_i32 dim 1 : vector<8x256xf32>, i32 -> vector<8x256xf32>
    %130 = vector.extract_strided_slice %3 {offsets = [3, 0], sizes = [1, 256], strides = [1, 1]} : vector<9x256xf32> to vector<1x256xf32>
    %131 = vector.broadcast %130 : vector<1x256xf32> to vector<8x256xf32>
    %132 = arith.mulf %129, %131 : vector<8x256xf32>
    %133 = vector.extract_strided_slice %105 {offsets = [0, 3], sizes = [8, 1], strides = [1, 1]} : vector<8x9xf32> to vector<8x1xf32>
    %134 = vector.broadcast %133 : vector<8x1xf32> to vector<8x256xf32>
    %135 = arith.mulf %132, %134 : vector<8x256xf32>
    %136 = arith.addf %128, %135 : vector<8x256xf32>
    %137 = vector.extract_strided_slice %105 {offsets = [0, 4], sizes = [8, 1], strides = [1, 1]} : vector<8x9xf32> to vector<8x1xf32>
    %138 = vector.broadcast %137 : vector<8x1xf32> to vector<8x256xf32>
    %139 = arith.mulf %103, %138 : vector<8x256xf32>
    %140 = arith.addf %136, %139 : vector<8x256xf32>
    %c255_i32 = arith.constant 255 : i32
    %141 = tpu.dynamic_rotate %103 by %c255_i32 dim 1 : vector<8x256xf32>, i32 -> vector<8x256xf32>
    %142 = vector.extract_strided_slice %3 {offsets = [5, 0], sizes = [1, 256], strides = [1, 1]} : vector<9x256xf32> to vector<1x256xf32>
    %143 = vector.broadcast %142 : vector<1x256xf32> to vector<8x256xf32>
    %144 = arith.mulf %141, %143 : vector<8x256xf32>
    %145 = vector.extract_strided_slice %105 {offsets = [0, 5], sizes = [8, 1], strides = [1, 1]} : vector<8x9xf32> to vector<8x1xf32>
    %146 = vector.broadcast %145 : vector<8x1xf32> to vector<8x256xf32>
    %147 = arith.mulf %144, %146 : vector<8x256xf32>
    %148 = arith.addf %140, %147 : vector<8x256xf32>
    %c241_i32 = arith.constant 241 : i32
    %149 = tpu.dynamic_rotate %103 by %c241_i32 dim 1 : vector<8x256xf32>, i32 -> vector<8x256xf32>
    %150 = vector.extract_strided_slice %3 {offsets = [6, 0], sizes = [1, 256], strides = [1, 1]} : vector<9x256xf32> to vector<1x256xf32>
    %151 = vector.broadcast %150 : vector<1x256xf32> to vector<8x256xf32>
    %152 = arith.mulf %149, %151 : vector<8x256xf32>
    %153 = vector.extract_strided_slice %105 {offsets = [0, 6], sizes = [8, 1], strides = [1, 1]} : vector<8x9xf32> to vector<8x1xf32>
    %154 = vector.broadcast %153 : vector<8x1xf32> to vector<8x256xf32>
    %155 = arith.mulf %152, %154 : vector<8x256xf32>
    %156 = arith.addf %148, %155 : vector<8x256xf32>
    %c240_i32 = arith.constant 240 : i32
    %157 = tpu.dynamic_rotate %103 by %c240_i32 dim 1 : vector<8x256xf32>, i32 -> vector<8x256xf32>
    %158 = vector.extract_strided_slice %3 {offsets = [7, 0], sizes = [1, 256], strides = [1, 1]} : vector<9x256xf32> to vector<1x256xf32>
    %159 = vector.broadcast %158 : vector<1x256xf32> to vector<8x256xf32>
    %160 = arith.mulf %157, %159 : vector<8x256xf32>
    %161 = vector.extract_strided_slice %105 {offsets = [0, 7], sizes = [8, 1], strides = [1, 1]} : vector<8x9xf32> to vector<8x1xf32>
    %162 = vector.broadcast %161 : vector<8x1xf32> to vector<8x256xf32>
    %163 = arith.mulf %160, %162 : vector<8x256xf32>
    %164 = arith.addf %156, %163 : vector<8x256xf32>
    %c239_i32 = arith.constant 239 : i32
    %165 = tpu.dynamic_rotate %103 by %c239_i32 dim 1 : vector<8x256xf32>, i32 -> vector<8x256xf32>
    %166 = vector.extract_strided_slice %3 {offsets = [8, 0], sizes = [1, 256], strides = [1, 1]} : vector<9x256xf32> to vector<1x256xf32>
    %167 = vector.broadcast %166 : vector<1x256xf32> to vector<8x256xf32>
    %168 = arith.mulf %165, %167 : vector<8x256xf32>
    %169 = vector.extract_strided_slice %105 {offsets = [0, 8], sizes = [8, 1], strides = [1, 1]} : vector<8x9xf32> to vector<8x1xf32>
    %170 = vector.broadcast %169 : vector<8x1xf32> to vector<8x256xf32>
    %171 = arith.mulf %168, %170 : vector<8x256xf32>
    %172 = arith.addf %164, %171 : vector<8x256xf32>
    %173 = vector.broadcast %8 : vector<8x1xf32> to vector<8x256xf32>
    %174 = arith.addf %172, %173 : vector<8x256xf32>
    %175 = vector.extract_strided_slice %22 {offsets = [0, 0], sizes = [8, 1], strides = [1, 1]} : vector<8x8xf32> to vector<8x1xf32>
    %176 = vector.extract_strided_slice %54 {offsets = [0, 0], sizes = [1, 256], strides = [1, 1]} : vector<8x256xf32> to vector<1x256xf32>
    %177 = vector.broadcast %175 : vector<8x1xf32> to vector<8x256xf32>
    %178 = vector.broadcast %176 : vector<1x256xf32> to vector<8x256xf32>
    %179 = arith.mulf %177, %178 : vector<8x256xf32>
    %180 = vector.extract_strided_slice %22 {offsets = [0, 1], sizes = [8, 1], strides = [1, 1]} : vector<8x8xf32> to vector<8x1xf32>
    %181 = vector.extract_strided_slice %54 {offsets = [1, 0], sizes = [1, 256], strides = [1, 1]} : vector<8x256xf32> to vector<1x256xf32>
    %182 = vector.broadcast %180 : vector<8x1xf32> to vector<8x256xf32>
    %183 = vector.broadcast %181 : vector<1x256xf32> to vector<8x256xf32>
    %184 = arith.mulf %182, %183 : vector<8x256xf32>
    %185 = arith.addf %179, %184 : vector<8x256xf32>
    %186 = vector.extract_strided_slice %22 {offsets = [0, 2], sizes = [8, 1], strides = [1, 1]} : vector<8x8xf32> to vector<8x1xf32>
    %187 = vector.extract_strided_slice %54 {offsets = [2, 0], sizes = [1, 256], strides = [1, 1]} : vector<8x256xf32> to vector<1x256xf32>
    %188 = vector.broadcast %186 : vector<8x1xf32> to vector<8x256xf32>
    %189 = vector.broadcast %187 : vector<1x256xf32> to vector<8x256xf32>
    %190 = arith.mulf %188, %189 : vector<8x256xf32>
    %191 = arith.addf %185, %190 : vector<8x256xf32>
    %192 = vector.extract_strided_slice %22 {offsets = [0, 3], sizes = [8, 1], strides = [1, 1]} : vector<8x8xf32> to vector<8x1xf32>
    %193 = vector.extract_strided_slice %54 {offsets = [3, 0], sizes = [1, 256], strides = [1, 1]} : vector<8x256xf32> to vector<1x256xf32>
    %194 = vector.broadcast %192 : vector<8x1xf32> to vector<8x256xf32>
    %195 = vector.broadcast %193 : vector<1x256xf32> to vector<8x256xf32>
    %196 = arith.mulf %194, %195 : vector<8x256xf32>
    %197 = arith.addf %191, %196 : vector<8x256xf32>
    %198 = vector.extract_strided_slice %22 {offsets = [0, 4], sizes = [8, 1], strides = [1, 1]} : vector<8x8xf32> to vector<8x1xf32>
    %199 = vector.extract_strided_slice %54 {offsets = [4, 0], sizes = [1, 256], strides = [1, 1]} : vector<8x256xf32> to vector<1x256xf32>
    %200 = vector.broadcast %198 : vector<8x1xf32> to vector<8x256xf32>
    %201 = vector.broadcast %199 : vector<1x256xf32> to vector<8x256xf32>
    %202 = arith.mulf %200, %201 : vector<8x256xf32>
    %203 = arith.addf %197, %202 : vector<8x256xf32>
    %204 = vector.extract_strided_slice %22 {offsets = [0, 5], sizes = [8, 1], strides = [1, 1]} : vector<8x8xf32> to vector<8x1xf32>
    %205 = vector.extract_strided_slice %54 {offsets = [5, 0], sizes = [1, 256], strides = [1, 1]} : vector<8x256xf32> to vector<1x256xf32>
    %206 = vector.broadcast %204 : vector<8x1xf32> to vector<8x256xf32>
    %207 = vector.broadcast %205 : vector<1x256xf32> to vector<8x256xf32>
    %208 = arith.mulf %206, %207 : vector<8x256xf32>
    %209 = arith.addf %203, %208 : vector<8x256xf32>
    %210 = vector.extract_strided_slice %22 {offsets = [0, 6], sizes = [8, 1], strides = [1, 1]} : vector<8x8xf32> to vector<8x1xf32>
    %211 = vector.extract_strided_slice %54 {offsets = [6, 0], sizes = [1, 256], strides = [1, 1]} : vector<8x256xf32> to vector<1x256xf32>
    %212 = vector.broadcast %210 : vector<8x1xf32> to vector<8x256xf32>
    %213 = vector.broadcast %211 : vector<1x256xf32> to vector<8x256xf32>
    %214 = arith.mulf %212, %213 : vector<8x256xf32>
    %215 = arith.addf %209, %214 : vector<8x256xf32>
    %216 = vector.extract_strided_slice %22 {offsets = [0, 7], sizes = [8, 1], strides = [1, 1]} : vector<8x8xf32> to vector<8x1xf32>
    %217 = vector.extract_strided_slice %54 {offsets = [7, 0], sizes = [1, 256], strides = [1, 1]} : vector<8x256xf32> to vector<1x256xf32>
    %218 = vector.broadcast %216 : vector<8x1xf32> to vector<8x256xf32>
    %219 = vector.broadcast %217 : vector<1x256xf32> to vector<8x256xf32>
    %220 = arith.mulf %218, %219 : vector<8x256xf32>
    %221 = arith.addf %215, %220 : vector<8x256xf32>
    %222 = vector.broadcast %7 : vector<8x1xf32> to vector<8x256xf32>
    %223 = arith.addf %221, %222 : vector<8x256xf32>
    %c1_28 = arith.constant 1 : index
    %c0_29 = arith.constant 0 : index
    %c0_30 = arith.constant 0 : index
    %224 = vector.load %arg4[%c1_28, %c0_29, %c0_30] : memref<2x8x9xf32, #tpu.memory_space<vmem>>, vector<1x8x9xf32>
    %225 = vector.shape_cast %224 : vector<1x8x9xf32> to vector<8x9xf32>
    %c17_i32_31 = arith.constant 17 : i32
    %226 = tpu.dynamic_rotate %223 by %c17_i32_31 dim 1 : vector<8x256xf32>, i32 -> vector<8x256xf32>
    %227 = vector.extract_strided_slice %3 {offsets = [0, 0], sizes = [1, 256], strides = [1, 1]} : vector<9x256xf32> to vector<1x256xf32>
    %228 = vector.broadcast %227 : vector<1x256xf32> to vector<8x256xf32>
    %229 = arith.mulf %226, %228 : vector<8x256xf32>
    %230 = vector.extract_strided_slice %225 {offsets = [0, 0], sizes = [8, 1], strides = [1, 1]} : vector<8x9xf32> to vector<8x1xf32>
    %231 = vector.broadcast %230 : vector<8x1xf32> to vector<8x256xf32>
    %232 = arith.mulf %229, %231 : vector<8x256xf32>
    %c16_i32_32 = arith.constant 16 : i32
    %233 = tpu.dynamic_rotate %223 by %c16_i32_32 dim 1 : vector<8x256xf32>, i32 -> vector<8x256xf32>
    %234 = vector.extract_strided_slice %3 {offsets = [1, 0], sizes = [1, 256], strides = [1, 1]} : vector<9x256xf32> to vector<1x256xf32>
    %235 = vector.broadcast %234 : vector<1x256xf32> to vector<8x256xf32>
    %236 = arith.mulf %233, %235 : vector<8x256xf32>
    %237 = vector.extract_strided_slice %225 {offsets = [0, 1], sizes = [8, 1], strides = [1, 1]} : vector<8x9xf32> to vector<8x1xf32>
    %238 = vector.broadcast %237 : vector<8x1xf32> to vector<8x256xf32>
    %239 = arith.mulf %236, %238 : vector<8x256xf32>
    %240 = arith.addf %232, %239 : vector<8x256xf32>
    %c15_i32_33 = arith.constant 15 : i32
    %241 = tpu.dynamic_rotate %223 by %c15_i32_33 dim 1 : vector<8x256xf32>, i32 -> vector<8x256xf32>
    %242 = vector.extract_strided_slice %3 {offsets = [2, 0], sizes = [1, 256], strides = [1, 1]} : vector<9x256xf32> to vector<1x256xf32>
    %243 = vector.broadcast %242 : vector<1x256xf32> to vector<8x256xf32>
    %244 = arith.mulf %241, %243 : vector<8x256xf32>
    %245 = vector.extract_strided_slice %225 {offsets = [0, 2], sizes = [8, 1], strides = [1, 1]} : vector<8x9xf32> to vector<8x1xf32>
    %246 = vector.broadcast %245 : vector<8x1xf32> to vector<8x256xf32>
    %247 = arith.mulf %244, %246 : vector<8x256xf32>
    %248 = arith.addf %240, %247 : vector<8x256xf32>
    %c1_i32_34 = arith.constant 1 : i32
    %249 = tpu.dynamic_rotate %223 by %c1_i32_34 dim 1 : vector<8x256xf32>, i32 -> vector<8x256xf32>
    %250 = vector.extract_strided_slice %3 {offsets = [3, 0], sizes = [1, 256], strides = [1, 1]} : vector<9x256xf32> to vector<1x256xf32>
    %251 = vector.broadcast %250 : vector<1x256xf32> to vector<8x256xf32>
    %252 = arith.mulf %249, %251 : vector<8x256xf32>
    %253 = vector.extract_strided_slice %225 {offsets = [0, 3], sizes = [8, 1], strides = [1, 1]} : vector<8x9xf32> to vector<8x1xf32>
    %254 = vector.broadcast %253 : vector<8x1xf32> to vector<8x256xf32>
    %255 = arith.mulf %252, %254 : vector<8x256xf32>
    %256 = arith.addf %248, %255 : vector<8x256xf32>
    %257 = vector.extract_strided_slice %225 {offsets = [0, 4], sizes = [8, 1], strides = [1, 1]} : vector<8x9xf32> to vector<8x1xf32>
    %258 = vector.broadcast %257 : vector<8x1xf32> to vector<8x256xf32>
    %259 = arith.mulf %223, %258 : vector<8x256xf32>
    %260 = arith.addf %256, %259 : vector<8x256xf32>
    %c255_i32_35 = arith.constant 255 : i32
    %261 = tpu.dynamic_rotate %223 by %c255_i32_35 dim 1 : vector<8x256xf32>, i32 -> vector<8x256xf32>
    %262 = vector.extract_strided_slice %3 {offsets = [5, 0], sizes = [1, 256], strides = [1, 1]} : vector<9x256xf32> to vector<1x256xf32>
    %263 = vector.broadcast %262 : vector<1x256xf32> to vector<8x256xf32>
    %264 = arith.mulf %261, %263 : vector<8x256xf32>
    %265 = vector.extract_strided_slice %225 {offsets = [0, 5], sizes = [8, 1], strides = [1, 1]} : vector<8x9xf32> to vector<8x1xf32>
    %266 = vector.broadcast %265 : vector<8x1xf32> to vector<8x256xf32>
    %267 = arith.mulf %264, %266 : vector<8x256xf32>
    %268 = arith.addf %260, %267 : vector<8x256xf32>
    %c241_i32_36 = arith.constant 241 : i32
    %269 = tpu.dynamic_rotate %223 by %c241_i32_36 dim 1 : vector<8x256xf32>, i32 -> vector<8x256xf32>
    %270 = vector.extract_strided_slice %3 {offsets = [6, 0], sizes = [1, 256], strides = [1, 1]} : vector<9x256xf32> to vector<1x256xf32>
    %271 = vector.broadcast %270 : vector<1x256xf32> to vector<8x256xf32>
    %272 = arith.mulf %269, %271 : vector<8x256xf32>
    %273 = vector.extract_strided_slice %225 {offsets = [0, 6], sizes = [8, 1], strides = [1, 1]} : vector<8x9xf32> to vector<8x1xf32>
    %274 = vector.broadcast %273 : vector<8x1xf32> to vector<8x256xf32>
    %275 = arith.mulf %272, %274 : vector<8x256xf32>
    %276 = arith.addf %268, %275 : vector<8x256xf32>
    %c240_i32_37 = arith.constant 240 : i32
    %277 = tpu.dynamic_rotate %223 by %c240_i32_37 dim 1 : vector<8x256xf32>, i32 -> vector<8x256xf32>
    %278 = vector.extract_strided_slice %3 {offsets = [7, 0], sizes = [1, 256], strides = [1, 1]} : vector<9x256xf32> to vector<1x256xf32>
    %279 = vector.broadcast %278 : vector<1x256xf32> to vector<8x256xf32>
    %280 = arith.mulf %277, %279 : vector<8x256xf32>
    %281 = vector.extract_strided_slice %225 {offsets = [0, 7], sizes = [8, 1], strides = [1, 1]} : vector<8x9xf32> to vector<8x1xf32>
    %282 = vector.broadcast %281 : vector<8x1xf32> to vector<8x256xf32>
    %283 = arith.mulf %280, %282 : vector<8x256xf32>
    %284 = arith.addf %276, %283 : vector<8x256xf32>
    %c239_i32_38 = arith.constant 239 : i32
    %285 = tpu.dynamic_rotate %223 by %c239_i32_38 dim 1 : vector<8x256xf32>, i32 -> vector<8x256xf32>
    %286 = vector.extract_strided_slice %3 {offsets = [8, 0], sizes = [1, 256], strides = [1, 1]} : vector<9x256xf32> to vector<1x256xf32>
    %287 = vector.broadcast %286 : vector<1x256xf32> to vector<8x256xf32>
    %288 = arith.mulf %285, %287 : vector<8x256xf32>
    %289 = vector.extract_strided_slice %225 {offsets = [0, 8], sizes = [8, 1], strides = [1, 1]} : vector<8x9xf32> to vector<8x1xf32>
    %290 = vector.broadcast %289 : vector<8x1xf32> to vector<8x256xf32>
    %291 = arith.mulf %288, %290 : vector<8x256xf32>
    %292 = arith.addf %284, %291 : vector<8x256xf32>
    %293 = vector.broadcast %9 : vector<8x1xf32> to vector<8x256xf32>
    %294 = arith.addf %292, %293 : vector<8x256xf32>
    %295 = arith.mulf %174, %294 : vector<8x256xf32>
    %cst_39 = arith.constant dense<0.000000e+00> : vector<8xf32>
    %296 = vector.multi_reduction <add>, %295, %cst_39 [1] : vector<8x256xf32> to vector<8xf32>
    %297 = vector.shape_cast %296 : vector<8xf32> to vector<8x1xf32>
    %cst_40 = arith.constant 2.560000e+02 : f32
    %298 = vector.broadcast %cst_40 : f32 to vector<8x1xf32>
    %299 = arith.divf %297, %298 : vector<8x1xf32>
    %300 = vector.extract_strided_slice %24 {offsets = [0, 0], sizes = [8, 1], strides = [1, 1]} : vector<8x8xf32> to vector<8x1xf32>
    %301 = vector.extract_strided_slice %299 {offsets = [0, 0], sizes = [1, 1], strides = [1, 1]} : vector<8x1xf32> to vector<1x1xf32>
    %302 = vector.broadcast %301 : vector<1x1xf32> to vector<8x1xf32>
    %303 = arith.mulf %300, %302 : vector<8x1xf32>
    %304 = vector.extract_strided_slice %24 {offsets = [0, 1], sizes = [8, 1], strides = [1, 1]} : vector<8x8xf32> to vector<8x1xf32>
    %305 = vector.extract_strided_slice %299 {offsets = [1, 0], sizes = [1, 1], strides = [1, 1]} : vector<8x1xf32> to vector<1x1xf32>
    %306 = vector.broadcast %305 : vector<1x1xf32> to vector<8x1xf32>
    %307 = arith.mulf %304, %306 : vector<8x1xf32>
    %308 = arith.addf %303, %307 : vector<8x1xf32>
    %309 = vector.extract_strided_slice %24 {offsets = [0, 2], sizes = [8, 1], strides = [1, 1]} : vector<8x8xf32> to vector<8x1xf32>
    %310 = vector.extract_strided_slice %299 {offsets = [2, 0], sizes = [1, 1], strides = [1, 1]} : vector<8x1xf32> to vector<1x1xf32>
    %311 = vector.broadcast %310 : vector<1x1xf32> to vector<8x1xf32>
    %312 = arith.mulf %309, %311 : vector<8x1xf32>
    %313 = arith.addf %308, %312 : vector<8x1xf32>
    %314 = vector.extract_strided_slice %24 {offsets = [0, 3], sizes = [8, 1], strides = [1, 1]} : vector<8x8xf32> to vector<8x1xf32>
    %315 = vector.extract_strided_slice %299 {offsets = [3, 0], sizes = [1, 1], strides = [1, 1]} : vector<8x1xf32> to vector<1x1xf32>
    %316 = vector.broadcast %315 : vector<1x1xf32> to vector<8x1xf32>
    %317 = arith.mulf %314, %316 : vector<8x1xf32>
    %318 = arith.addf %313, %317 : vector<8x1xf32>
    %319 = vector.extract_strided_slice %24 {offsets = [0, 4], sizes = [8, 1], strides = [1, 1]} : vector<8x8xf32> to vector<8x1xf32>
    %320 = vector.extract_strided_slice %299 {offsets = [4, 0], sizes = [1, 1], strides = [1, 1]} : vector<8x1xf32> to vector<1x1xf32>
    %321 = vector.broadcast %320 : vector<1x1xf32> to vector<8x1xf32>
    %322 = arith.mulf %319, %321 : vector<8x1xf32>
    %323 = arith.addf %318, %322 : vector<8x1xf32>
    %324 = vector.extract_strided_slice %24 {offsets = [0, 5], sizes = [8, 1], strides = [1, 1]} : vector<8x8xf32> to vector<8x1xf32>
    %325 = vector.extract_strided_slice %299 {offsets = [5, 0], sizes = [1, 1], strides = [1, 1]} : vector<8x1xf32> to vector<1x1xf32>
    %326 = vector.broadcast %325 : vector<1x1xf32> to vector<8x1xf32>
    %327 = arith.mulf %324, %326 : vector<8x1xf32>
    %328 = arith.addf %323, %327 : vector<8x1xf32>
    %329 = vector.extract_strided_slice %24 {offsets = [0, 6], sizes = [8, 1], strides = [1, 1]} : vector<8x8xf32> to vector<8x1xf32>
    %330 = vector.extract_strided_slice %299 {offsets = [6, 0], sizes = [1, 1], strides = [1, 1]} : vector<8x1xf32> to vector<1x1xf32>
    %331 = vector.broadcast %330 : vector<1x1xf32> to vector<8x1xf32>
    %332 = arith.mulf %329, %331 : vector<8x1xf32>
    %333 = arith.addf %328, %332 : vector<8x1xf32>
    %334 = vector.extract_strided_slice %24 {offsets = [0, 7], sizes = [8, 1], strides = [1, 1]} : vector<8x8xf32> to vector<8x1xf32>
    %335 = vector.extract_strided_slice %299 {offsets = [7, 0], sizes = [1, 1], strides = [1, 1]} : vector<8x1xf32> to vector<1x1xf32>
    %336 = vector.broadcast %335 : vector<1x1xf32> to vector<8x1xf32>
    %337 = arith.mulf %334, %336 : vector<8x1xf32>
    %338 = arith.addf %333, %337 : vector<8x1xf32>
    %339 = arith.addf %338, %10 : vector<8x1xf32>
    %340 = vector.broadcast %339 : vector<8x1xf32> to vector<8x256xf32>
    %341 = arith.mulf %295, %340 : vector<8x256xf32>
    %342 = vector.extract_strided_slice %26 {offsets = [0, 0], sizes = [8, 1], strides = [1, 1]} : vector<8x8xf32> to vector<8x1xf32>
    %343 = vector.extract_strided_slice %341 {offsets = [0, 0], sizes = [1, 256], strides = [1, 1]} : vector<8x256xf32> to vector<1x256xf32>
    %344 = vector.broadcast %342 : vector<8x1xf32> to vector<8x256xf32>
    %345 = vector.broadcast %343 : vector<1x256xf32> to vector<8x256xf32>
    %346 = arith.mulf %344, %345 : vector<8x256xf32>
    %347 = vector.extract_strided_slice %26 {offsets = [0, 1], sizes = [8, 1], strides = [1, 1]} : vector<8x8xf32> to vector<8x1xf32>
    %348 = vector.extract_strided_slice %341 {offsets = [1, 0], sizes = [1, 256], strides = [1, 1]} : vector<8x256xf32> to vector<1x256xf32>
    %349 = vector.broadcast %347 : vector<8x1xf32> to vector<8x256xf32>
    %350 = vector.broadcast %348 : vector<1x256xf32> to vector<8x256xf32>
    %351 = arith.mulf %349, %350 : vector<8x256xf32>
    %352 = arith.addf %346, %351 : vector<8x256xf32>
    %353 = vector.extract_strided_slice %26 {offsets = [0, 2], sizes = [8, 1], strides = [1, 1]} : vector<8x8xf32> to vector<8x1xf32>
    %354 = vector.extract_strided_slice %341 {offsets = [2, 0], sizes = [1, 256], strides = [1, 1]} : vector<8x256xf32> to vector<1x256xf32>
    %355 = vector.broadcast %353 : vector<8x1xf32> to vector<8x256xf32>
    %356 = vector.broadcast %354 : vector<1x256xf32> to vector<8x256xf32>
    %357 = arith.mulf %355, %356 : vector<8x256xf32>
    %358 = arith.addf %352, %357 : vector<8x256xf32>
    %359 = vector.extract_strided_slice %26 {offsets = [0, 3], sizes = [8, 1], strides = [1, 1]} : vector<8x8xf32> to vector<8x1xf32>
    %360 = vector.extract_strided_slice %341 {offsets = [3, 0], sizes = [1, 256], strides = [1, 1]} : vector<8x256xf32> to vector<1x256xf32>
    %361 = vector.broadcast %359 : vector<8x1xf32> to vector<8x256xf32>
    %362 = vector.broadcast %360 : vector<1x256xf32> to vector<8x256xf32>
    %363 = arith.mulf %361, %362 : vector<8x256xf32>
    %364 = arith.addf %358, %363 : vector<8x256xf32>
    %365 = vector.extract_strided_slice %26 {offsets = [0, 4], sizes = [8, 1], strides = [1, 1]} : vector<8x8xf32> to vector<8x1xf32>
    %366 = vector.extract_strided_slice %341 {offsets = [4, 0], sizes = [1, 256], strides = [1, 1]} : vector<8x256xf32> to vector<1x256xf32>
    %367 = vector.broadcast %365 : vector<8x1xf32> to vector<8x256xf32>
    %368 = vector.broadcast %366 : vector<1x256xf32> to vector<8x256xf32>
    %369 = arith.mulf %367, %368 : vector<8x256xf32>
    %370 = arith.addf %364, %369 : vector<8x256xf32>
    %371 = vector.extract_strided_slice %26 {offsets = [0, 5], sizes = [8, 1], strides = [1, 1]} : vector<8x8xf32> to vector<8x1xf32>
    %372 = vector.extract_strided_slice %341 {offsets = [5, 0], sizes = [1, 256], strides = [1, 1]} : vector<8x256xf32> to vector<1x256xf32>
    %373 = vector.broadcast %371 : vector<8x1xf32> to vector<8x256xf32>
    %374 = vector.broadcast %372 : vector<1x256xf32> to vector<8x256xf32>
    %375 = arith.mulf %373, %374 : vector<8x256xf32>
    %376 = arith.addf %370, %375 : vector<8x256xf32>
    %377 = vector.extract_strided_slice %26 {offsets = [0, 6], sizes = [8, 1], strides = [1, 1]} : vector<8x8xf32> to vector<8x1xf32>
    %378 = vector.extract_strided_slice %341 {offsets = [6, 0], sizes = [1, 256], strides = [1, 1]} : vector<8x256xf32> to vector<1x256xf32>
    %379 = vector.broadcast %377 : vector<8x1xf32> to vector<8x256xf32>
    %380 = vector.broadcast %378 : vector<1x256xf32> to vector<8x256xf32>
    %381 = arith.mulf %379, %380 : vector<8x256xf32>
    %382 = arith.addf %376, %381 : vector<8x256xf32>
    %383 = vector.extract_strided_slice %26 {offsets = [0, 7], sizes = [8, 1], strides = [1, 1]} : vector<8x8xf32> to vector<8x1xf32>
    %384 = vector.extract_strided_slice %341 {offsets = [7, 0], sizes = [1, 256], strides = [1, 1]} : vector<8x256xf32> to vector<1x256xf32>
    %385 = vector.broadcast %383 : vector<8x1xf32> to vector<8x256xf32>
    %386 = vector.broadcast %384 : vector<1x256xf32> to vector<8x256xf32>
    %387 = arith.mulf %385, %386 : vector<8x256xf32>
    %388 = arith.addf %382, %387 : vector<8x256xf32>
    %389 = vector.broadcast %11 : vector<8x1xf32> to vector<8x256xf32>
    %390 = arith.addf %388, %389 : vector<8x256xf32>
    %391 = vector.broadcast %12 : vector<8x1xf32> to vector<8x256xf32>
    %392 = arith.mulf %390, %391 : vector<8x256xf32>
    %393 = arith.addf %1, %392 : vector<8x256xf32>
    %cst_41 = arith.constant dense<0.000000e+00> : vector<256xf32>
    %394 = vector.multi_reduction <add>, %393, %cst_41 [0] : vector<8x256xf32> to vector<256xf32>
    %395 = vector.shape_cast %394 : vector<256xf32> to vector<1x256xf32>
    %cst_42 = arith.constant 8.000000e+00 : f32
    %396 = vector.broadcast %cst_42 : f32 to vector<1x256xf32>
    %397 = arith.divf %395, %396 : vector<1x256xf32>
    %398 = arith.mulf %393, %393 : vector<8x256xf32>
    %cst_43 = arith.constant dense<0.000000e+00> : vector<256xf32>
    %399 = vector.multi_reduction <add>, %398, %cst_43 [0] : vector<8x256xf32> to vector<256xf32>
    %400 = vector.shape_cast %399 : vector<256xf32> to vector<1x256xf32>
    %cst_44 = arith.constant 8.000000e+00 : f32
    %401 = vector.broadcast %cst_44 : f32 to vector<1x256xf32>
    %402 = arith.divf %400, %401 : vector<1x256xf32>
    %403 = arith.mulf %397, %397 : vector<1x256xf32>
    %404 = arith.subf %402, %403 : vector<1x256xf32>
    %cst_45 = arith.constant 9.99999997E-7 : f32
    %405 = vector.broadcast %cst_45 : f32 to vector<1x256xf32>
    %406 = arith.addf %404, %405 : vector<1x256xf32>
    %407 = math.rsqrt %406 : vector<1x256xf32>
    %408 = vector.broadcast %397 : vector<1x256xf32> to vector<8x256xf32>
    %409 = arith.subf %393, %408 : vector<8x256xf32>
    %410 = vector.broadcast %407 : vector<1x256xf32> to vector<8x256xf32>
    %411 = arith.mulf %409, %410 : vector<8x256xf32>
    %412 = vector.broadcast %13 : vector<8x1xf32> to vector<8x256xf32>
    %413 = arith.mulf %411, %412 : vector<8x256xf32>
    %414 = vector.broadcast %14 : vector<8x1xf32> to vector<8x256xf32>
    %415 = arith.addf %413, %414 : vector<8x256xf32>
    %416 = vector.extract_strided_slice %28 {offsets = [0, 0], sizes = [8, 1], strides = [1, 1]} : vector<8x8xf32> to vector<8x1xf32>
    %417 = vector.extract_strided_slice %415 {offsets = [0, 0], sizes = [1, 256], strides = [1, 1]} : vector<8x256xf32> to vector<1x256xf32>
    %418 = vector.broadcast %416 : vector<8x1xf32> to vector<8x256xf32>
    %419 = vector.broadcast %417 : vector<1x256xf32> to vector<8x256xf32>
    %420 = arith.mulf %418, %419 : vector<8x256xf32>
    %421 = vector.extract_strided_slice %28 {offsets = [0, 1], sizes = [8, 1], strides = [1, 1]} : vector<8x8xf32> to vector<8x1xf32>
    %422 = vector.extract_strided_slice %415 {offsets = [1, 0], sizes = [1, 256], strides = [1, 1]} : vector<8x256xf32> to vector<1x256xf32>
    %423 = vector.broadcast %421 : vector<8x1xf32> to vector<8x256xf32>
    %424 = vector.broadcast %422 : vector<1x256xf32> to vector<8x256xf32>
    %425 = arith.mulf %423, %424 : vector<8x256xf32>
    %426 = arith.addf %420, %425 : vector<8x256xf32>
    %427 = vector.extract_strided_slice %28 {offsets = [0, 2], sizes = [8, 1], strides = [1, 1]} : vector<8x8xf32> to vector<8x1xf32>
    %428 = vector.extract_strided_slice %415 {offsets = [2, 0], sizes = [1, 256], strides = [1, 1]} : vector<8x256xf32> to vector<1x256xf32>
    %429 = vector.broadcast %427 : vector<8x1xf32> to vector<8x256xf32>
    %430 = vector.broadcast %428 : vector<1x256xf32> to vector<8x256xf32>
    %431 = arith.mulf %429, %430 : vector<8x256xf32>
    %432 = arith.addf %426, %431 : vector<8x256xf32>
    %433 = vector.extract_strided_slice %28 {offsets = [0, 3], sizes = [8, 1], strides = [1, 1]} : vector<8x8xf32> to vector<8x1xf32>
    %434 = vector.extract_strided_slice %415 {offsets = [3, 0], sizes = [1, 256], strides = [1, 1]} : vector<8x256xf32> to vector<1x256xf32>
    %435 = vector.broadcast %433 : vector<8x1xf32> to vector<8x256xf32>
    %436 = vector.broadcast %434 : vector<1x256xf32> to vector<8x256xf32>
    %437 = arith.mulf %435, %436 : vector<8x256xf32>
    %438 = arith.addf %432, %437 : vector<8x256xf32>
    %439 = vector.extract_strided_slice %28 {offsets = [0, 4], sizes = [8, 1], strides = [1, 1]} : vector<8x8xf32> to vector<8x1xf32>
    %440 = vector.extract_strided_slice %415 {offsets = [4, 0], sizes = [1, 256], strides = [1, 1]} : vector<8x256xf32> to vector<1x256xf32>
    %441 = vector.broadcast %439 : vector<8x1xf32> to vector<8x256xf32>
    %442 = vector.broadcast %440 : vector<1x256xf32> to vector<8x256xf32>
    %443 = arith.mulf %441, %442 : vector<8x256xf32>
    %444 = arith.addf %438, %443 : vector<8x256xf32>
    %445 = vector.extract_strided_slice %28 {offsets = [0, 5], sizes = [8, 1], strides = [1, 1]} : vector<8x8xf32> to vector<8x1xf32>
    %446 = vector.extract_strided_slice %415 {offsets = [5, 0], sizes = [1, 256], strides = [1, 1]} : vector<8x256xf32> to vector<1x256xf32>
    %447 = vector.broadcast %445 : vector<8x1xf32> to vector<8x256xf32>
    %448 = vector.broadcast %446 : vector<1x256xf32> to vector<8x256xf32>
    %449 = arith.mulf %447, %448 : vector<8x256xf32>
    %450 = arith.addf %444, %449 : vector<8x256xf32>
    %451 = vector.extract_strided_slice %28 {offsets = [0, 6], sizes = [8, 1], strides = [1, 1]} : vector<8x8xf32> to vector<8x1xf32>
    %452 = vector.extract_strided_slice %415 {offsets = [6, 0], sizes = [1, 256], strides = [1, 1]} : vector<8x256xf32> to vector<1x256xf32>
    %453 = vector.broadcast %451 : vector<8x1xf32> to vector<8x256xf32>
    %454 = vector.broadcast %452 : vector<1x256xf32> to vector<8x256xf32>
    %455 = arith.mulf %453, %454 : vector<8x256xf32>
    %456 = arith.addf %450, %455 : vector<8x256xf32>
    %457 = vector.extract_strided_slice %28 {offsets = [0, 7], sizes = [8, 1], strides = [1, 1]} : vector<8x8xf32> to vector<8x1xf32>
    %458 = vector.extract_strided_slice %415 {offsets = [7, 0], sizes = [1, 256], strides = [1, 1]} : vector<8x256xf32> to vector<1x256xf32>
    %459 = vector.broadcast %457 : vector<8x1xf32> to vector<8x256xf32>
    %460 = vector.broadcast %458 : vector<1x256xf32> to vector<8x256xf32>
    %461 = arith.mulf %459, %460 : vector<8x256xf32>
    %462 = arith.addf %456, %461 : vector<8x256xf32>
    %463 = vector.broadcast %15 : vector<8x1xf32> to vector<8x256xf32>
    %464 = arith.addf %462, %463 : vector<8x256xf32>
    %465 = vector.extract_strided_slice %30 {offsets = [0, 0], sizes = [8, 1], strides = [1, 1]} : vector<8x8xf32> to vector<8x1xf32>
    %466 = vector.extract_strided_slice %415 {offsets = [0, 0], sizes = [1, 256], strides = [1, 1]} : vector<8x256xf32> to vector<1x256xf32>
    %467 = vector.broadcast %465 : vector<8x1xf32> to vector<8x256xf32>
    %468 = vector.broadcast %466 : vector<1x256xf32> to vector<8x256xf32>
    %469 = arith.mulf %467, %468 : vector<8x256xf32>
    %470 = vector.extract_strided_slice %30 {offsets = [0, 1], sizes = [8, 1], strides = [1, 1]} : vector<8x8xf32> to vector<8x1xf32>
    %471 = vector.extract_strided_slice %415 {offsets = [1, 0], sizes = [1, 256], strides = [1, 1]} : vector<8x256xf32> to vector<1x256xf32>
    %472 = vector.broadcast %470 : vector<8x1xf32> to vector<8x256xf32>
    %473 = vector.broadcast %471 : vector<1x256xf32> to vector<8x256xf32>
    %474 = arith.mulf %472, %473 : vector<8x256xf32>
    %475 = arith.addf %469, %474 : vector<8x256xf32>
    %476 = vector.extract_strided_slice %30 {offsets = [0, 2], sizes = [8, 1], strides = [1, 1]} : vector<8x8xf32> to vector<8x1xf32>
    %477 = vector.extract_strided_slice %415 {offsets = [2, 0], sizes = [1, 256], strides = [1, 1]} : vector<8x256xf32> to vector<1x256xf32>
    %478 = vector.broadcast %476 : vector<8x1xf32> to vector<8x256xf32>
    %479 = vector.broadcast %477 : vector<1x256xf32> to vector<8x256xf32>
    %480 = arith.mulf %478, %479 : vector<8x256xf32>
    %481 = arith.addf %475, %480 : vector<8x256xf32>
    %482 = vector.extract_strided_slice %30 {offsets = [0, 3], sizes = [8, 1], strides = [1, 1]} : vector<8x8xf32> to vector<8x1xf32>
    %483 = vector.extract_strided_slice %415 {offsets = [3, 0], sizes = [1, 256], strides = [1, 1]} : vector<8x256xf32> to vector<1x256xf32>
    %484 = vector.broadcast %482 : vector<8x1xf32> to vector<8x256xf32>
    %485 = vector.broadcast %483 : vector<1x256xf32> to vector<8x256xf32>
    %486 = arith.mulf %484, %485 : vector<8x256xf32>
    %487 = arith.addf %481, %486 : vector<8x256xf32>
    %488 = vector.extract_strided_slice %30 {offsets = [0, 4], sizes = [8, 1], strides = [1, 1]} : vector<8x8xf32> to vector<8x1xf32>
    %489 = vector.extract_strided_slice %415 {offsets = [4, 0], sizes = [1, 256], strides = [1, 1]} : vector<8x256xf32> to vector<1x256xf32>
    %490 = vector.broadcast %488 : vector<8x1xf32> to vector<8x256xf32>
    %491 = vector.broadcast %489 : vector<1x256xf32> to vector<8x256xf32>
    %492 = arith.mulf %490, %491 : vector<8x256xf32>
    %493 = arith.addf %487, %492 : vector<8x256xf32>
    %494 = vector.extract_strided_slice %30 {offsets = [0, 5], sizes = [8, 1], strides = [1, 1]} : vector<8x8xf32> to vector<8x1xf32>
    %495 = vector.extract_strided_slice %415 {offsets = [5, 0], sizes = [1, 256], strides = [1, 1]} : vector<8x256xf32> to vector<1x256xf32>
    %496 = vector.broadcast %494 : vector<8x1xf32> to vector<8x256xf32>
    %497 = vector.broadcast %495 : vector<1x256xf32> to vector<8x256xf32>
    %498 = arith.mulf %496, %497 : vector<8x256xf32>
    %499 = arith.addf %493, %498 : vector<8x256xf32>
    %500 = vector.extract_strided_slice %30 {offsets = [0, 6], sizes = [8, 1], strides = [1, 1]} : vector<8x8xf32> to vector<8x1xf32>
    %501 = vector.extract_strided_slice %415 {offsets = [6, 0], sizes = [1, 256], strides = [1, 1]} : vector<8x256xf32> to vector<1x256xf32>
    %502 = vector.broadcast %500 : vector<8x1xf32> to vector<8x256xf32>
    %503 = vector.broadcast %501 : vector<1x256xf32> to vector<8x256xf32>
    %504 = arith.mulf %502, %503 : vector<8x256xf32>
    %505 = arith.addf %499, %504 : vector<8x256xf32>
    %506 = vector.extract_strided_slice %30 {offsets = [0, 7], sizes = [8, 1], strides = [1, 1]} : vector<8x8xf32> to vector<8x1xf32>
    %507 = vector.extract_strided_slice %415 {offsets = [7, 0], sizes = [1, 256], strides = [1, 1]} : vector<8x256xf32> to vector<1x256xf32>
    %508 = vector.broadcast %506 : vector<8x1xf32> to vector<8x256xf32>
    %509 = vector.broadcast %507 : vector<1x256xf32> to vector<8x256xf32>
    %510 = arith.mulf %508, %509 : vector<8x256xf32>
    %511 = arith.addf %505, %510 : vector<8x256xf32>
    %512 = vector.broadcast %16 : vector<8x1xf32> to vector<8x256xf32>
    %513 = arith.addf %511, %512 : vector<8x256xf32>
    %514 = arith.mulf %464, %513 : vector<8x256xf32>
    %515 = vector.extract_strided_slice %32 {offsets = [0, 0], sizes = [8, 1], strides = [1, 1]} : vector<8x8xf32> to vector<8x1xf32>
    %516 = vector.extract_strided_slice %514 {offsets = [0, 0], sizes = [1, 256], strides = [1, 1]} : vector<8x256xf32> to vector<1x256xf32>
    %517 = vector.broadcast %515 : vector<8x1xf32> to vector<8x256xf32>
    %518 = vector.broadcast %516 : vector<1x256xf32> to vector<8x256xf32>
    %519 = arith.mulf %517, %518 : vector<8x256xf32>
    %520 = vector.extract_strided_slice %32 {offsets = [0, 1], sizes = [8, 1], strides = [1, 1]} : vector<8x8xf32> to vector<8x1xf32>
    %521 = vector.extract_strided_slice %514 {offsets = [1, 0], sizes = [1, 256], strides = [1, 1]} : vector<8x256xf32> to vector<1x256xf32>
    %522 = vector.broadcast %520 : vector<8x1xf32> to vector<8x256xf32>
    %523 = vector.broadcast %521 : vector<1x256xf32> to vector<8x256xf32>
    %524 = arith.mulf %522, %523 : vector<8x256xf32>
    %525 = arith.addf %519, %524 : vector<8x256xf32>
    %526 = vector.extract_strided_slice %32 {offsets = [0, 2], sizes = [8, 1], strides = [1, 1]} : vector<8x8xf32> to vector<8x1xf32>
    %527 = vector.extract_strided_slice %514 {offsets = [2, 0], sizes = [1, 256], strides = [1, 1]} : vector<8x256xf32> to vector<1x256xf32>
    %528 = vector.broadcast %526 : vector<8x1xf32> to vector<8x256xf32>
    %529 = vector.broadcast %527 : vector<1x256xf32> to vector<8x256xf32>
    %530 = arith.mulf %528, %529 : vector<8x256xf32>
    %531 = arith.addf %525, %530 : vector<8x256xf32>
    %532 = vector.extract_strided_slice %32 {offsets = [0, 3], sizes = [8, 1], strides = [1, 1]} : vector<8x8xf32> to vector<8x1xf32>
    %533 = vector.extract_strided_slice %514 {offsets = [3, 0], sizes = [1, 256], strides = [1, 1]} : vector<8x256xf32> to vector<1x256xf32>
    %534 = vector.broadcast %532 : vector<8x1xf32> to vector<8x256xf32>
    %535 = vector.broadcast %533 : vector<1x256xf32> to vector<8x256xf32>
    %536 = arith.mulf %534, %535 : vector<8x256xf32>
    %537 = arith.addf %531, %536 : vector<8x256xf32>
    %538 = vector.extract_strided_slice %32 {offsets = [0, 4], sizes = [8, 1], strides = [1, 1]} : vector<8x8xf32> to vector<8x1xf32>
    %539 = vector.extract_strided_slice %514 {offsets = [4, 0], sizes = [1, 256], strides = [1, 1]} : vector<8x256xf32> to vector<1x256xf32>
    %540 = vector.broadcast %538 : vector<8x1xf32> to vector<8x256xf32>
    %541 = vector.broadcast %539 : vector<1x256xf32> to vector<8x256xf32>
    %542 = arith.mulf %540, %541 : vector<8x256xf32>
    %543 = arith.addf %537, %542 : vector<8x256xf32>
    %544 = vector.extract_strided_slice %32 {offsets = [0, 5], sizes = [8, 1], strides = [1, 1]} : vector<8x8xf32> to vector<8x1xf32>
    %545 = vector.extract_strided_slice %514 {offsets = [5, 0], sizes = [1, 256], strides = [1, 1]} : vector<8x256xf32> to vector<1x256xf32>
    %546 = vector.broadcast %544 : vector<8x1xf32> to vector<8x256xf32>
    %547 = vector.broadcast %545 : vector<1x256xf32> to vector<8x256xf32>
    %548 = arith.mulf %546, %547 : vector<8x256xf32>
    %549 = arith.addf %543, %548 : vector<8x256xf32>
    %550 = vector.extract_strided_slice %32 {offsets = [0, 6], sizes = [8, 1], strides = [1, 1]} : vector<8x8xf32> to vector<8x1xf32>
    %551 = vector.extract_strided_slice %514 {offsets = [6, 0], sizes = [1, 256], strides = [1, 1]} : vector<8x256xf32> to vector<1x256xf32>
    %552 = vector.broadcast %550 : vector<8x1xf32> to vector<8x256xf32>
    %553 = vector.broadcast %551 : vector<1x256xf32> to vector<8x256xf32>
    %554 = arith.mulf %552, %553 : vector<8x256xf32>
    %555 = arith.addf %549, %554 : vector<8x256xf32>
    %556 = vector.extract_strided_slice %32 {offsets = [0, 7], sizes = [8, 1], strides = [1, 1]} : vector<8x8xf32> to vector<8x1xf32>
    %557 = vector.extract_strided_slice %514 {offsets = [7, 0], sizes = [1, 256], strides = [1, 1]} : vector<8x256xf32> to vector<1x256xf32>
    %558 = vector.broadcast %556 : vector<8x1xf32> to vector<8x256xf32>
    %559 = vector.broadcast %557 : vector<1x256xf32> to vector<8x256xf32>
    %560 = arith.mulf %558, %559 : vector<8x256xf32>
    %561 = arith.addf %555, %560 : vector<8x256xf32>
    %562 = vector.broadcast %17 : vector<8x1xf32> to vector<8x256xf32>
    %563 = arith.addf %561, %562 : vector<8x256xf32>
    %564 = vector.broadcast %18 : vector<8x1xf32> to vector<8x256xf32>
    %565 = arith.mulf %563, %564 : vector<8x256xf32>
    %566 = arith.addf %393, %565 : vector<8x256xf32>
    %c0_46 = arith.constant 0 : index
    %c0_47 = arith.constant 0 : index
    %c0_48 = arith.constant 0 : index
    %567 = vector.load %arg6[%c0_46, %c0_47, %c0_48] : memref<1x8x256xf32, #tpu.memory_space<vmem>>, vector<1x8x256xf32>
    %568 = vector.shape_cast %567 : vector<1x8x256xf32> to vector<8x256xf32>
    %569 = vector.shape_cast %566 : vector<8x256xf32> to vector<1x8x256xf32>
    tpu.vector_store %arg6[%c0_46, %c0_47, %c0_48], %569 {strides = array<i32>} : memref<1x8x256xf32, #tpu.memory_space<vmem>>, vector<1x8x256xf32>,
    return
  }
  func.func @transform_0(%arg0: i32) -> (i32, i32, i32) {
    %c0_i32 = arith.constant 0 : i32
    %c0_i32_0 = arith.constant 0 : i32
    %c0_i32_1 = arith.constant 0 : i32
    return %arg0, %c0_i32, %c0_i32_0 : i32, i32, i32
  }
  func.func @transform_1(%arg0: i32) -> (i32, i32, i32) {
    %c0_i32 = arith.constant 0 : i32
    %c0_i32_0 = arith.constant 0 : i32
    %c0_i32_1 = arith.constant 0 : i32
    %c0_i32_2 = arith.constant 0 : i32
    return %c0_i32, %c0_i32_0, %c0_i32_1 : i32, i32, i32
  }
  func.func @transform_2(%arg0: i32) -> (i32, i32) {
    %c0_i32 = arith.constant 0 : i32
    %c0_i32_0 = arith.constant 0 : i32
    %c0_i32_1 = arith.constant 0 : i32
    return %c0_i32, %c0_i32_0 : i32, i32
  }
  func.func @transform_3(%arg0: i32) -> (i32, i32, i32) {
    %c0_i32 = arith.constant 0 : i32
    %c0_i32_0 = arith.constant 0 : i32
    %c0_i32_1 = arith.constant 0 : i32
    %c0_i32_2 = arith.constant 0 : i32
    return %c0_i32, %c0_i32_0, %c0_i32_1 : i32, i32, i32
  }
  func.func @transform_4(%arg0: i32) -> (i32, i32) {
    %c0_i32 = arith.constant 0 : i32
    %c0_i32_0 = arith.constant 0 : i32
    %c0_i32_1 = arith.constant 0 : i32
    return %c0_i32, %c0_i32_0 : i32, i32
  }
  func.func @transform_5(%arg0: i32) -> (i32, i32, i32) {
    %c0_i32 = arith.constant 0 : i32
    %c0_i32_0 = arith.constant 0 : i32
    %c0_i32_1 = arith.constant 0 : i32
    return %arg0, %c0_i32, %c0_i32_0 : i32, i32, i32
  }
}

</mosaic_0001>

<llo_original>
// kernel: tpu_custom_call.1
$region0: #{tpu_custom_call.1}
  #allocation0 [shape = 'u32[]', space=smem, size = 0x4, offset = 0x4, fixed_abs, tag = 'smem constant byte address 0x4 - core index']
  #allocation1 [shape = 'u32[144,128]{1,0:T(1,128)}', space=vmem, size = 0x12000, scoped, tag = 'internal scratch']
  %s0 = inlined_call_operand.hbm [shape: f32[2,8,256], index: 0, kind: input, shape index: {}]
  %s1 = inlined_call_operand.hbm [shape: f32[7,8,8], index: 1, kind: input, shape index: {}]
  %s2 = inlined_call_operand.hbm [shape: f32[8,15], index: 2, kind: input, shape index: {}]
  %s3 = inlined_call_operand.hbm [shape: f32[2,8,9], index: 3, kind: input, shape index: {}]
  %s4 = inlined_call_operand.hbm [shape: f32[9,256], index: 4, kind: input, shape index: {}]
  %s5 = inlined_call_operand.hbm [shape: f32[2,8,256], index: 5, kind: output, shape index: {}]
  %s6 = sld [smem:[#allocation0]]
  $region73: #{tpu_custom_call.1} parent=0
    _
  %s8 = ssub.s32 1, %s6
  %s9 = scalar_select 0, %s8, %s6
  $region1: #{tpu_custom_call.1} parent=0
    #allocation2 [shape = 'u8[16384]{0}', space=vmem, size = 0x4000, scoped, tag = 'input window, operand 0']
    #allocation3 [shape = 's32[2]{0}', space=sflag, size = 0x8, scoped, tag = 'scoped memory for tpu_custom_call.1']
    #allocation4 [shape = 's32[2]{0}', space=sflag, size = 0x8, scoped, tag = 'scoped memory for tpu_custom_call.1']
    #allocation5 [shape = 'u8[28672]{0}', space=vmem, size = 0x7000, scoped, tag = 'input window, operand 1, single buffered']
    #allocation6 [shape = 's32[1]{0}', space=sflag, size = 0x4, scoped, tag = 'scoped memory for tpu_custom_call.1']
    #allocation7 [shape = 'u8[4096]{0}', space=vmem, size = 0x1000, scoped, tag = 'input window, operand 2, single buffered']
    #allocation8 [shape = 'u8[8192]{0}', space=vmem, size = 0x2000, scoped, tag = 'input window, operand 3, single buffered']
    #allocation9 [shape = 's32[1]{0}', space=sflag, size = 0x4, scoped, tag = 'scoped memory for tpu_custom_call.1']
    #allocation10 [shape = 'u8[16384]{0}', space=vmem, size = 0x4000, scoped, tag = 'input window, operand 4, single buffered']
    #allocation11 [shape = 'u8[16384]{0}', space=vmem, size = 0x4000, scoped, tag = 'output window, operand 0']
    %10 = vsyncpa [#allocation3], 0
    %s11 = scalar_lea.sflag [#allocation3], 1
    %12 = vsyncpa %s11, 0
    %13 = vsyncpa [#allocation6], 0
    %14 = vsyncpa [#allocation9], 0
    %15 = vsyncpa [#allocation4], 0
    %s16 = scalar_lea.sflag [#allocation4], 1
    %17 = vsyncpa %s16, 0
    loop: start=0, step=1, limit=4
    $region2: #{tpu_custom_call.1} parent=1 // loop_pre_header
      _
    $region3: #{tpu_custom_call.1} parent=1 // loop_header
      %s19 = sphi 0, %s23
      %p20 = scmp.ge.s32.totalorder %s19, 4
      %s29 = sphi 0, %s31
      %s32 = sphi 0, %s29
      %s33 = sphi 0, %s32
      %s49 = sphi 0, %s33
      %s53 = sphi 0, %s53
      %s55 = sphi 0, %s53
      %s56 = sphi 0, %s55
      %s70 = sphi 0, %s56
      %s74 = sphi 0, %s74
      %s76 = sphi 0, %s74
      %s77 = sphi 0, %s76
      %s91 = sphi 0, %s77
      %s95 = sphi 0, %s95
      %s97 = sphi 0, %s95
      %s98 = sphi 0, %s97
      %s112 = sphi 0, %s98
      %s116 = sphi 0, %s116
      %s118 = sphi 0, %s116
      %s119 = sphi 0, %s118
      %s133 = sphi 0, %s119
      %s139 = sphi 0, %s141
      %s142 = sphi 0, %s139
      %s143 = sphi 0, %s142
      %s159 = sphi 0, %s143
    $region4: #{tpu_custom_call.1} parent=1 // loop_header_branch
      %22 = sbr.rel (%p20) target = $region8
    $region5: #{tpu_custom_call.1} parent=1 // loop_body
      %s24 = ssub.s32 %s19, 1
      %s25 = ssub.s32 %s19, 2
      %s26 = sadd.s32 %s19, 1
      %s27 = ssub.s32 %s19, %s26
      %p28 = scmp.eq.s32.totalorder %s27, 0
      %s30 = sadd.s32 %s29, 1
      %s31 = scalar_select %p28, %s29, %s30
      %p34 = pneg %p28
      %p35 = scmp.eq.s32.totalorder %s19, 1
      %p36 = por %p34, %p35
      %p37 = scmp.ne.s32.totalorder %s29, %s32
      %p38 = scmp.eq.s32.totalorder %s19, 0
      %p39 = por %p37, %p38
      %p40 = scmp.ne.s32.totalorder %s29, %s32
      %p41 = scmp.eq.s32.totalorder %s24, 1
      %p42 = por %p40, %p41
      %p43 = scmp.ne.s32.totalorder %s32, %s33
      %p44 = scmp.eq.s32.totalorder %s24, 0
      %p45 = por %p43, %p44
      %p46 = scmp.ne.s32.totalorder %s32, %s33
      %p47 = scmp.eq.s32.totalorder %s25, 1
      %p48 = por %p46, %p47
      %p50 = scmp.ne.s32.totalorder %s33, %s49
      %p51 = scmp.eq.s32.totalorder %s25, 0
      %p52 = por %p50, %p51
      %s54 = sadd.s32 %s53, 1
      %p57 = scmp.eq.s32.totalorder %s19, 1
      %p58 = scmp.ne.s32.totalorder %s53, %s55
      %p59 = scmp.eq.s32.totalorder %s19, 0
      %p60 = por %p58, %p59
      %p61 = scmp.ne.s32.totalorder %s53, %s55
      %p62 = scmp.eq.s32.totalorder %s24, 1
      %p63 = por %p61, %p62
      %p64 = scmp.ne.s32.totalorder %s55, %s56
      %p65 = scmp.eq.s32.totalorder %s24, 0
      %p66 = por %p64, %p65
      %p67 = scmp.ne.s32.totalorder %s55, %s56
      %p68 = scmp.eq.s32.totalorder %s25, 1
      %p69 = por %p67, %p68
      %p71 = scmp.ne.s32.totalorder %s56, %s70
      %p72 = scmp.eq.s32.totalorder %s25, 0
      %p73 = por %p71, %p72
      %s75 = sadd.s32 %s74, 1
      %p78 = scmp.eq.s32.totalorder %s19, 1
      %p79 = scmp.ne.s32.totalorder %s74, %s76
      %p80 = scmp.eq.s32.totalorder %s19, 0
      %p81 = por %p79, %p80
      %p82 = scmp.ne.s32.totalorder %s74, %s76
      %p83 = scmp.eq.s32.totalorder %s24, 1
      %p84 = por %p82, %p83
      %p85 = scmp.ne.s32.totalorder %s76, %s77
      %p86 = scmp.eq.s32.totalorder %s24, 0
      %p87 = por %p85, %p86
      %p88 = scmp.ne.s32.totalorder %s76, %s77
      %p89 = scmp.eq.s32.totalorder %s25, 1
      %p90 = por %p88, %p89
      %p92 = scmp.ne.s32.totalorder %s77, %s91
      %p93 = scmp.eq.s32.totalorder %s25, 0
      %p94 = por %p92, %p93
      %s96 = sadd.s32 %s95, 1
      %p99 = scmp.eq.s32.totalorder %s19, 1
      %p100 = scmp.ne.s32.totalorder %s95, %s97
      %p101 = scmp.eq.s32.totalorder %s19, 0
      %p102 = por %p100, %p101
      %p103 = scmp.ne.s32.totalorder %s95, %s97
      %p104 = scmp.eq.s32.totalorder %s24, 1
      %p105 = por %p103, %p104
      %p106 = scmp.ne.s32.totalorder %s97, %s98
      %p107 = scmp.eq.s32.totalorder %s24, 0
      %p108 = por %p106, %p107
      %p109 = scmp.ne.s32.totalorder %s97, %s98
      %p110 = scmp.eq.s32.totalorder %s25, 1
      %p111 = por %p109, %p110
      %p113 = scmp.ne.s32.totalorder %s98, %s112
      %p114 = scmp.eq.s32.totalorder %s25, 0
      %p115 = por %p113, %p114
      %s117 = sadd.s32 %s116, 1
      %p120 = scmp.eq.s32.totalorder %s19, 1
      %p121 = scmp.ne.s32.totalorder %s116, %s118
      %p122 = scmp.eq.s32.totalorder %s19, 0
      %p123 = por %p121, %p122
      %p124 = scmp.ne.s32.totalorder %s116, %s118
      %p125 = scmp.eq.s32.totalorder %s24, 1
      %p126 = por %p124, %p125
      %p127 = scmp.ne.s32.totalorder %s118, %s119
      %p128 = scmp.eq.s32.totalorder %s24, 0
      %p129 = por %p127, %p128
      %p130 = scmp.ne.s32.totalorder %s118, %s119
      %p131 = scmp.eq.s32.totalorder %s25, 1
      %p132 = por %p130, %p131
      %p134 = scmp.ne.s32.totalorder %s119, %s133
      %p135 = scmp.eq.s32.totalorder %s25, 0
      %p136 = por %p134, %p135
      %s137 = ssub.s32 %s19, %s26
      %p138 = scmp.eq.s32.totalorder %s137, 0
      %s140 = sadd.s32 %s139, 1
      %s141 = scalar_select %p138, %s139, %s140
      %p144 = pneg %p138
      %p145 = scmp.eq.s32.totalorder %s19, 1
      %p146 = por %p144, %p145
      %p147 = scmp.ne.s32.totalorder %s139, %s142
      %p148 = scmp.eq.s32.totalorder %s19, 0
      %p149 = por %p147, %p148
      %p150 = scmp.ne.s32.totalorder %s139, %s142
      %p151 = scmp.eq.s32.totalorder %s24, 1
      %p152 = por %p150, %p151
      %p153 = scmp.ne.s32.totalorder %s142, %s143
      %p154 = scmp.eq.s32.totalorder %s24, 0
      %p155 = por %p153, %p154
      %p156 = scmp.ne.s32.totalorder %s142, %s143
      %p157 = scmp.eq.s32.totalorder %s25, 1
      %p158 = por %p156, %p157
      %p160 = scmp.ne.s32.totalorder %s143, %s159
      %p161 = scmp.eq.s32.totalorder %s25, 0
      %p162 = por %p160, %p161
      %p163 = scmp.le.s32.totalorder 1, %s19
      %p164 = scmp.lt.s32.totalorder %s19, 3
      %p165 = pnand %p163, %p164
      %p166 = pneg %p165
      // Predicated region
      $region9: #{tpu_custom_call.1} parent=5 // pred_check
        _
      $region10: #{tpu_custom_call.1} parent=5 // pred_check_branch
        %168 = sbr.rel (%p165) target = $region12
      $region11: #{tpu_custom_call.1} parent=5 // pred_region
        %s169 = ssub.s32 %s19, 1
        // Predicated region
        $region13: #{tpu_custom_call.1} parent=11 // pred_check
          %p170 = pneg %p66
        $region14: #{tpu_custom_call.1} parent=11 // pred_check_branch
          %172 = sbr.rel (%p170) target = $region16
        $region15: #{tpu_custom_call.1} parent=11 // pred_region
          %s174 = ssub.s32 896, 896
          %175 = vsyncadd [#allocation6], %s174
          %s176 = sshll.u32 [#allocation5], 4
          %s177 = int_to_ptr.vmem [resolvable:$true] %s176
          %182 = dma.hbm_to_vmem [thread:$0]  %s1, 896, %s177, [#allocation6], 128, 128, 8
        $region16: #{tpu_custom_call.1} parent=11 // pred_fallthru
          _
        // Predicated region
        $region17: #{tpu_custom_call.1} parent=11 // pred_check
          %p183 = pneg %p87
        $region18: #{tpu_custom_call.1} parent=11 // pred_check_branch
          %185 = sbr.rel (%p183) target = $region20
        $region19: #{tpu_custom_call.1} parent=11 // pred_region
          %s187 = ssub.s32 128, 128
          %188 = vsyncadd [#allocation6], %s187
          %s190 = sshll.u32 [#allocation7], 4
          %s191 = int_to_ptr.vmem [resolvable:$true] %s190
          %193 = dma.hbm_to_vmem [thread:$0]  %s2, 128, %s191, [#allocation6]
        $region20: #{tpu_custom_call.1} parent=11 // pred_fallthru
          _
        // Predicated region
        $region21: #{tpu_custom_call.1} parent=11 // pred_check
          %p194 = pneg %p108
        $region22: #{tpu_custom_call.1} parent=11 // pred_check_branch
          %196 = sbr.rel (%p194) target = $region24
        $region23: #{tpu_custom_call.1} parent=11 // pred_region
          %s198 = ssub.s32 256, 256
          %199 = vsyncadd [#allocation9], %s198
          %s200 = sshll.u32 [#allocation8], 4
          %s201 = int_to_ptr.vmem [resolvable:$true] %s200
          %206 = dma.hbm_to_vmem [thread:$0]  %s3, 256, %s201, [#allocation9], 128, 128, 8
        $region24: #{tpu_custom_call.1} parent=11 // pred_fallthru
          _
        // Predicated region
        $region25: #{tpu_custom_call.1} parent=11 // pred_check
          %p207 = pneg %p129
        $region26: #{tpu_custom_call.1} parent=11 // pred_check_branch
          %209 = sbr.rel (%p207) target = $region28
        $region27: #{tpu_custom_call.1} parent=11 // pred_region
          %s211 = ssub.s32 512, 512
          %212 = vsyncadd [#allocation9], %s211
          %s213 = sshll.u32 [#allocation10], 4
          %s214 = int_to_ptr.vmem [resolvable:$true] %s213
          %219 = dma.hbm_to_vmem [thread:$0]  %s4, 512, %s214, [#allocation9], 256, 256, 16
        $region28: #{tpu_custom_call.1} parent=11 // pred_fallthru
          _
      $region12: #{tpu_custom_call.1} parent=5 // pred_fallthru
        _
      %p220 = scmp.lt.s32.totalorder %s19, 2
      // Predicated region
      $region29: #{tpu_custom_call.1} parent=5 // pred_check
        %p221 = pneg %p220
      $region30: #{tpu_custom_call.1} parent=5 // pred_check_branch
        %223 = sbr.rel (%p221) target = $region32
      $region31: #{tpu_custom_call.1} parent=5 // pred_region
        // Predicated region
        $region33: #{tpu_custom_call.1} parent=31 // pred_check
          %p224 = pneg %p39
        $region34: #{tpu_custom_call.1} parent=31 // pred_check_branch
          %226 = sbr.rel (%p224) target = $region36
        $region35: #{tpu_custom_call.1} parent=31 // pred_region
          %s227 = sand.u32 %s29, 1
          %s228 = scalar_lea.sflag [#allocation3], %s227
          %s229 = sand.u32 %s29, 1
          %s230 = smul.addr %s229, 16
          %s231 = scalar_lea.vmem [#allocation2], %s230
          %s233 = ssub.s32 256, 256
          %234 = vsyncadd %s228, %s233
          %s235 = smul.addr %s19, 2
          %s236 = smul.addr %s235, 128
          %s237 = scalar_lea.hbm %s0, %s236
          %s239 = sshll.u32 %s231, 4
          %s240 = int_to_ptr.vmem [resolvable:$true] %s239
          %242 = dma.hbm_to_vmem [thread:$0]  %s237, 256, %s240, %s228
        $region36: #{tpu_custom_call.1} parent=31 // pred_fallthru
          _
      $region32: #{tpu_custom_call.1} parent=5 // pred_fallthru
        _
      %p243 = scmp.le.s32.totalorder 1, %s19
      %p244 = scmp.lt.s32.totalorder %s19, 3
      %p245 = pnand %p243, %p244
      %p246 = pneg %p245
      // Predicated region
      $region37: #{tpu_custom_call.1} parent=5 // pred_check
        _
      $region38: #{tpu_custom_call.1} parent=5 // pred_check_branch
        %248 = sbr.rel (%p245) target = $region40
      $region39: #{tpu_custom_call.1} parent=5 // pred_region
        %s249 = ssub.s32 %s19, 1
        %s250 = sand.u32 %s32, 1
        %s251 = scalar_lea.sflag [#allocation3], %s250
        %s252 = sand.u32 %s32, 1
        %s253 = smul.addr %s252, 16
        %s254 = scalar_lea.vmem [#allocation2], %s253
        // Predicated region
        $region41: #{tpu_custom_call.1} parent=39 // pred_check
          %p255 = pneg %p45
        $region42: #{tpu_custom_call.1} parent=39 // pred_check_branch
          %257 = sbr.rel (%p255) target = $region44
        $region43: #{tpu_custom_call.1} parent=39 // pred_region
          %258 = dma.done %s251, 256
        $region44: #{tpu_custom_call.1} parent=39 // pred_fallthru
          _
        // Predicated region
        $region45: #{tpu_custom_call.1} parent=39 // pred_check
          %p259 = pneg %p66
        $region46: #{tpu_custom_call.1} parent=39 // pred_check_branch
          %261 = sbr.rel (%p259) target = $region48
        $region47: #{tpu_custom_call.1} parent=39 // pred_region
          %262 = dma.done [#allocation6], 896
        $region48: #{tpu_custom_call.1} parent=39 // pred_fallthru
          _
        // Predicated region
        $region49: #{tpu_custom_call.1} parent=39 // pred_check
          %p263 = pneg %p87
        $region50: #{tpu_custom_call.1} parent=39 // pred_check_branch
          %265 = sbr.rel (%p263) target = $region52
        $region51: #{tpu_custom_call.1} parent=39 // pred_region
          %266 = dma.done [#allocation6], 128
        $region52: #{tpu_custom_call.1} parent=39 // pred_fallthru
          _
        // Predicated region
        $region53: #{tpu_custom_call.1} parent=39 // pred_check
          %p267 = pneg %p108
        $region54: #{tpu_custom_call.1} parent=39 // pred_check_branch
          %269 = sbr.rel (%p267) target = $region56
        $region55: #{tpu_custom_call.1} parent=39 // pred_region
          %270 = dma.done [#allocation9], 256
        $region56: #{tpu_custom_call.1} parent=39 // pred_fallthru
          _
        // Predicated region
        $region57: #{tpu_custom_call.1} parent=39 // pred_check
          %p271 = pneg %p129
        $region58: #{tpu_custom_call.1} parent=39 // pred_check_branch
          %273 = sbr.rel (%p271) target = $region60
        $region59: #{tpu_custom_call.1} parent=39 // pred_region
          %274 = dma.done [#allocation9], 512
        $region60: #{tpu_custom_call.1} parent=39 // pred_fallthru
          _
        %s275 = sand.u32 %s32, 1
        %s276 = scalar_lea.sflag [#allocation3], %s275
        %s277 = sand.u32 %s32, 1
        %s278 = smul.addr %s277, 16
        %s279 = scalar_lea.vmem [#allocation2], %s278
        %p280 = pneg %p45
        %p281 = pneg %p42
        %p282 = pneg %p66
        %p283 = pneg %p63
        %p284 = pneg %p87
        %p285 = pneg %p84
        %p286 = pneg %p108
        %p287 = pneg %p105
        %p288 = pneg %p129
        %p289 = pneg %p126
        %p290 = pneg %p155
        %p291 = pneg %p152
        %s292 = sand.u32 %s142, 1
        %s293 = scalar_lea.sflag [#allocation4], %s292
        %s294 = sand.u32 %s142, 1
        %s295 = smul.addr %s294, 16
        %s296 = scalar_lea.vmem [#allocation11], %s295
        %v297 = vld [vmem:[%s254] sm:$0xff]
        %v298 = vld [vmem:[%s254 + $0x8] sm:$0xff]
        %v299 = vld [vmem:[#allocation7] sm:$0xff]
        %v300 = vld [vmem:[#allocation10] sm:$0xff]
        %v301 = vld [vmem:[#allocation10 + $0x8] sm:$0xff]
        %v302 = vld [vmem:[#allocation10 + $0x10] sm:$0x1]
        %v303 = vld [vmem:[#allocation10 + $0x18] sm:$0x1]
        %v304 = vld [vmem:[#allocation5] sm:$0xff]
        %s305 = scalar_lea.vmem [#allocation5], 8
        %v306 = vld [vmem:[%s305] sm:$0xff]
        %s307 = scalar_lea.vmem [#allocation5], 16
        %v308 = vld [vmem:[%s307] sm:$0xff]
        %s309 = scalar_lea.vmem [#allocation5], 24
        %v310 = vld [vmem:[%s309] sm:$0xff]
        %s311 = scalar_lea.vmem [#allocation5], 32
        %v312 = vld [vmem:[%s311] sm:$0xff]
        %s313 = scalar_lea.vmem [#allocation5], 40
        %v314 = vld [vmem:[%s313] sm:$0xff]
        %s315 = scalar_lea.vmem [#allocation5], 48
        %v316 = vld [vmem:[%s315] sm:$0xff]
        %v317 = vrot.slane %v297, 4
        %v318 = vadd.f32 %v297, %v317
        %v319 = vrot.slane %v318, 2
        %v320 = vadd.f32 %v318, %v319
        %v321 = vrot.slane %v320, 1
        %v322 = vadd.f32 %v320, %v321
        %v323 = vrot.slane %v298, 4
        %v324 = vadd.f32 %v298, %v323
        %v325 = vrot.slane %v324, 2
        %v326 = vadd.f32 %v324, %v325
        %v327 = vrot.slane %v326, 1
        %v328 = vadd.f32 %v326, %v327
        %v329 = vrcp.pop 8.0
        %v330 = vmul.f32 %v322, %v329
        %v331 = vmul.f32 %v328, %v329
        %v332 = vmul.f32 %v297, %v297
        %v333 = vmul.f32 %v298, %v298
        %v334 = vrot.slane %v332, 4
        %v335 = vadd.f32 %v332, %v334
        %v336 = vrot.slane %v335, 2
        %v337 = vadd.f32 %v335, %v336
        %v338 = vrot.slane %v337, 1
        %v339 = vadd.f32 %v337, %v338
        %v340 = vrot.slane %v333, 4
        %v341 = vadd.f32 %v333, %v340
        %v342 = vrot.slane %v341, 2
        %v343 = vadd.f32 %v341, %v342
        %v344 = vrot.slane %v343, 1
        %v345 = vadd.f32 %v343, %v344
        %v346 = vmul.f32 %v339, %v329
        %v347 = vmul.f32 %v345, %v329
        %v348 = vmul.f32 %v330, %v330
        %v349 = vmul.f32 %v331, %v331
        %v350 = vsub.f32 %v346, %v348
        %v351 = vsub.f32 %v347, %v349
        %v352 = vadd.f32 %v350, 1e-06
        %v353 = vadd.f32 %v351, 1e-06
        %v354 = vrsqrt.pop %v352
        %v355 = vrsqrt.pop %v353
        %v356 = vsub.f32 %v297, %v330
        %v357 = vsub.f32 %v298, %v331
        %v358 = vmul.f32 %v356, %v354
        %v359 = vmul.f32 %v357, %v355
        %361 = vset.pattern.permute.xlu0 0
        %362 = vperm.xlu0 %361, %v299
        %v363 = vpop.permute.xlu0 %362
        %v365 = vmul.f32 %v358, %v363
        %v366 = vmul.f32 %v359, %v363
        %367 = vset.pattern.permute.xlu0 1
        %368 = vperm.xlu0 %367, %v299
        %v369 = vpop.permute.xlu0 %368
        %v371 = vadd.f32 %v365, %v369
        %v372 = vadd.f32 %v366, %v369
        %374 = vset.pattern.permute.xlu0 0
        %375 = vperm.xlu0 %374, %v304
        %v376 = vpop.permute.xlu0 %375
        %v378 = vlaneseq
        %v379 = vshrl.u32 %v378, 7
        %v380 = vsub.s32 0, %v379
        %v381 = vrot.slane %v371, %v380
        %v382 = vlaneseq
        %v383 = vshrl.u32 %v382, 7
        %v384 = vsub.s32 0, %v383
        %v385 = vrot.slane %v372, %v384
        %v386 = vmul.f32 %v376, %v381
        %v387 = vmul.f32 %v376, %v385
        %388 = vset.pattern.permute.xlu0 1
        %389 = vperm.xlu0 %388, %v304
        %v390 = vpop.permute.xlu0 %389
        %v392 = vlaneseq
        %v393 = vshrl.u32 %v392, 7
        %v394 = vsub.s32 1, %v393
        %v395 = vrot.slane %v371, %v394
        %v396 = vlaneseq
        %v397 = vshrl.u32 %v396, 7
        %v398 = vsub.s32 1, %v397
        %v399 = vrot.slane %v372, %v398
        %v400 = vmul.f32 %v390, %v395
        %v401 = vmul.f32 %v390, %v399
        %v402 = vadd.f32 %v386, %v400
        %v403 = vadd.f32 %v387, %v401
        %404 = vset.pattern.permute.xlu0 2
        %405 = vperm.xlu0 %404, %v304
        %v406 = vpop.permute.xlu0 %405
        %v408 = vlaneseq
        %v409 = vshrl.u32 %v408, 7
        %v410 = vsub.s32 2, %v409
        %v411 = vrot.slane %v371, %v410
        %v412 = vlaneseq
        %v413 = vshrl.u32 %v412, 7
        %v414 = vsub.s32 2, %v413
        %v415 = vrot.slane %v372, %v414
        %v416 = vmul.f32 %v406, %v411
        %v417 = vmul.f32 %v406, %v415
        %v418 = vadd.f32 %v402, %v416
        %v419 = vadd.f32 %v403, %v417
        %420 = vset.pattern.permute.xlu0 3
        %421 = vperm.xlu0 %420, %v304
        %v422 = vpop.permute.xlu0 %421
        %v424 = vlaneseq
        %v425 = vshrl.u32 %v424, 7
        %v426 = vsub.s32 3, %v425
        %v427 = vrot.slane %v371, %v426
        %v428 = vlaneseq
        %v429 = vshrl.u32 %v428, 7
        %v430 = vsub.s32 3, %v429
        %v431 = vrot.slane %v372, %v430
        %v432 = vmul.f32 %v422, %v427
        %v433 = vmul.f32 %v422, %v431
        %v434 = vadd.f32 %v418, %v432
        %v435 = vadd.f32 %v419, %v433
        %436 = vset.pattern.permute.xlu0 4
        %437 = vperm.xlu0 %436, %v304
        %v438 = vpop.permute.xlu0 %437
        %v440 = vlaneseq
        %v441 = vshrl.u32 %v440, 7
        %v442 = vsub.s32 4, %v441
        %v443 = vrot.slane %v371, %v442
        %v444 = vlaneseq
        %v445 = vshrl.u32 %v444, 7
        %v446 = vsub.s32 4, %v445
        %v447 = vrot.slane %v372, %v446
        %v448 = vmul.f32 %v438, %v443
        %v449 = vmul.f32 %v438, %v447
        %v450 = vadd.f32 %v434, %v448
        %v451 = vadd.f32 %v435, %v449
        %452 = vset.pattern.permute.xlu0 5
        %453 = vperm.xlu0 %452, %v304
        %v454 = vpop.permute.xlu0 %453
        %v456 = vlaneseq
        %v457 = vshrl.u32 %v456, 7
        %v458 = vsub.s32 5, %v457
        %v459 = vrot.slane %v371, %v458
        %v460 = vlaneseq
        %v461 = vshrl.u32 %v460, 7
        %v462 = vsub.s32 5, %v461
        %v463 = vrot.slane %v372, %v462
        %v464 = vmul.f32 %v454, %v459
        %v465 = vmul.f32 %v454, %v463
        %v466 = vadd.f32 %v450, %v464
        %v467 = vadd.f32 %v451, %v465
        %468 = vset.pattern.permute.xlu0 6
        %469 = vperm.xlu0 %468, %v304
        %v470 = vpop.permute.xlu0 %469
        %v472 = vlaneseq
        %v473 = vshrl.u32 %v472, 7
        %v474 = vsub.s32 6, %v473
        %v475 = vrot.slane %v371, %v474
        %v476 = vlaneseq
        %v477 = vshrl.u32 %v476, 7
        %v478 = vsub.s32 6, %v477
        %v479 = vrot.slane %v372, %v478
        %v480 = vmul.f32 %v470, %v475
        %v481 = vmul.f32 %v470, %v479
        %v482 = vadd.f32 %v466, %v480
        %v483 = vadd.f32 %v467, %v481
        %484 = vset.pattern.permute.xlu0 7
        %485 = vperm.xlu0 %484, %v304
        %v486 = vpop.permute.xlu0 %485
        %v488 = vlaneseq
        %v489 = vshrl.u32 %v488, 7
        %v490 = vsub.s32 7, %v489
        %v491 = vrot.slane %v371, %v490
        %v492 = vlaneseq
        %v493 = vshrl.u32 %v492, 7
        %v494 = vsub.s32 7, %v493
        %v495 = vrot.slane %v372, %v494
        %v496 = vmul.f32 %v486, %v491
        %v497 = vmul.f32 %v486, %v495
        %v498 = vadd.f32 %v482, %v496
        %v499 = vadd.f32 %v483, %v497
        %500 = vset.pattern.permute.xlu0 2
        %501 = vperm.xlu0 %500, %v299
        %v502 = vpop.permute.xlu0 %501
        %v504 = vadd.f32 %v498, %v502
        %v505 = vadd.f32 %v499, %v502
        %v506 = vld [vmem:[#allocation8] sm:$0xff]
        %507 = vrot.lane.b32.xlu0 %v504, 17
        %v508 = vpop.permute.xlu0 %507
        %509 = vrot.lane.b32.xlu0 %v505, 17
        %v510 = vpop.permute.xlu0 %509
        %v511 = vlaneseq
        %v512 = vand.u32 %v511, 127
        %vm513 = vcmp.lt.s32.totalorder %v512, 17
        %v514 = vsel %vm513, %v508, %v510
        %v515 = vsel %vm513, %v510, %v508
        %v516 = vlaneseq
        %v517 = vshrl.u32 %v516, 7
        %v518 = vsub.s32 0, %v517
        %v519 = vrot.slane %v300, %v518
        %v520 = vlaneseq
        %v521 = vshrl.u32 %v520, 7
        %v522 = vsub.s32 0, %v521
        %v523 = vrot.slane %v301, %v522
        %v524 = vmul.f32 %v515, %v519
        %v525 = vmul.f32 %v514, %v523
        %527 = vset.pattern.permute.xlu0 0
        %528 = vperm.xlu0 %527, %v506
        %v529 = vpop.permute.xlu0 %528
        %v531 = vmul.f32 %v524, %v529
        %v532 = vmul.f32 %v525, %v529
        %533 = vrot.lane.b32.xlu0 %v504, 16
        %v534 = vpop.permute.xlu0 %533
        %535 = vrot.lane.b32.xlu0 %v505, 16
        %v536 = vpop.permute.xlu0 %535
        %vm537 = vcmp.lt.s32.totalorder %v512, 16
        %v538 = vsel %vm537, %v534, %v536
        %v539 = vsel %vm537, %v536, %v534
        %v540 = vlaneseq
        %v541 = vshrl.u32 %v540, 7
        %v542 = vsub.s32 1, %v541
        %v543 = vrot.slane %v300, %v542
        %v544 = vlaneseq
        %v545 = vshrl.u32 %v544, 7
        %v546 = vsub.s32 1, %v545
        %v547 = vrot.slane %v301, %v546
        %v548 = vmul.f32 %v539, %v543
        %v549 = vmul.f32 %v538, %v547
        %550 = vset.pattern.permute.xlu0 1
        %551 = vperm.xlu0 %550, %v506
        %v552 = vpop.permute.xlu0 %551
        %v554 = vmul.f32 %v548, %v552
        %v555 = vmul.f32 %v549, %v552
        %v556 = vadd.f32 %v531, %v554
        %v557 = vadd.f32 %v532, %v555
        %558 = vrot.lane.b32.xlu0 %v504, 15
        %v559 = vpop.permute.xlu0 %558
        %560 = vrot.lane.b32.xlu0 %v505, 15
        %v561 = vpop.permute.xlu0 %560
        %vm562 = vcmp.lt.s32.totalorder %v512, 15
        %v563 = vsel %vm562, %v559, %v561
        %v564 = vsel %vm562, %v561, %v559
        %v565 = vlaneseq
        %v566 = vshrl.u32 %v565, 7
        %v567 = vsub.s32 2, %v566
        %v568 = vrot.slane %v300, %v567
        %v569 = vlaneseq
        %v570 = vshrl.u32 %v569, 7
        %v571 = vsub.s32 2, %v570
        %v572 = vrot.slane %v301, %v571
        %v573 = vmul.f32 %v564, %v568
        %v574 = vmul.f32 %v563, %v572
        %575 = vset.pattern.permute.xlu0 2
        %576 = vperm.xlu0 %575, %v506
        %v577 = vpop.permute.xlu0 %576
        %v579 = vmul.f32 %v573, %v577
        %v580 = vmul.f32 %v574, %v577
        %v581 = vadd.f32 %v556, %v579
        %v582 = vadd.f32 %v557, %v580
        %583 = vrot.lane.b32.xlu0 %v504, 1
        %v584 = vpop.permute.xlu0 %583
        %585 = vrot.lane.b32.xlu0 %v505, 1
        %v586 = vpop.permute.xlu0 %585
        %vm587 = vcmp.lt.s32.totalorder %v512, 1
        %v588 = vsel %vm587, %v584, %v586
        %v589 = vsel %vm587, %v586, %v584
        %v590 = vlaneseq
        %v591 = vshrl.u32 %v590, 7
        %v592 = vsub.s32 3, %v591
        %v593 = vrot.slane %v300, %v592
        %v594 = vlaneseq
        %v595 = vshrl.u32 %v594, 7
        %v596 = vsub.s32 3, %v595
        %v597 = vrot.slane %v301, %v596
        %v598 = vmul.f32 %v589, %v593
        %v599 = vmul.f32 %v588, %v597
        %600 = vset.pattern.permute.xlu0 3
        %601 = vperm.xlu0 %600, %v506
        %v602 = vpop.permute.xlu0 %601
        %v604 = vmul.f32 %v598, %v602
        %v605 = vmul.f32 %v599, %v602
        %v606 = vadd.f32 %v581, %v604
        %v607 = vadd.f32 %v582, %v605
        %608 = vset.pattern.permute.xlu0 4
        %609 = vperm.xlu0 %608, %v506
        %v610 = vpop.permute.xlu0 %609
        %v612 = vmul.f32 %v504, %v610
        %v613 = vmul.f32 %v505, %v610
        %v614 = vadd.f32 %v606, %v612
        %v615 = vadd.f32 %v607, %v613
        %616 = vrot.lane.b32.xlu0 %v504, 127
        %v617 = vpop.permute.xlu0 %616
        %618 = vrot.lane.b32.xlu0 %v505, 127
        %v619 = vpop.permute.xlu0 %618
        %vm620 = vcmp.lt.s32.totalorder %v512, 127
        %v621 = vsel %vm620, %v617, %v619
        %v622 = vsel %vm620, %v619, %v617
        %v623 = vlaneseq
        %v624 = vshrl.u32 %v623, 7
        %v625 = vsub.s32 5, %v624
        %v626 = vrot.slane %v300, %v625
        %v627 = vlaneseq
        %v628 = vshrl.u32 %v627, 7
        %v629 = vsub.s32 5, %v628
        %v630 = vrot.slane %v301, %v629
        %v631 = vmul.f32 %v621, %v626
        %v632 = vmul.f32 %v622, %v630
        %633 = vset.pattern.permute.xlu0 5
        %634 = vperm.xlu0 %633, %v506
        %v635 = vpop.permute.xlu0 %634
        %v637 = vmul.f32 %v631, %v635
        %v638 = vmul.f32 %v632, %v635
        %v639 = vadd.f32 %v614, %v637
        %v640 = vadd.f32 %v615, %v638
        %641 = vrot.lane.b32.xlu0 %v504, 113
        %v642 = vpop.permute.xlu0 %641
        %643 = vrot.lane.b32.xlu0 %v505, 113
        %v644 = vpop.permute.xlu0 %643
        %vm645 = vcmp.lt.s32.totalorder %v512, 113
        %v646 = vsel %vm645, %v642, %v644
        %v647 = vsel %vm645, %v644, %v642
        %v648 = vlaneseq
        %v649 = vshrl.u32 %v648, 7
        %v650 = vsub.s32 6, %v649
        %v651 = vrot.slane %v300, %v650
        %v652 = vlaneseq
        %v653 = vshrl.u32 %v652, 7
        %v654 = vsub.s32 6, %v653
        %v655 = vrot.slane %v301, %v654
        %v656 = vmul.f32 %v646, %v651
        %v657 = vmul.f32 %v647, %v655
        %658 = vset.pattern.permute.xlu0 6
        %659 = vperm.xlu0 %658, %v506
        %v660 = vpop.permute.xlu0 %659
        %v662 = vmul.f32 %v656, %v660
        %v663 = vmul.f32 %v657, %v660
        %v664 = vadd.f32 %v639, %v662
        %v665 = vadd.f32 %v640, %v663
        %666 = vrot.lane.b32.xlu0 %v504, 112
        %v667 = vpop.permute.xlu0 %666
        %668 = vrot.lane.b32.xlu0 %v505, 112
        %v669 = vpop.permute.xlu0 %668
        %vm670 = vcmp.lt.s32.totalorder %v512, 112
        %v671 = vsel %vm670, %v667, %v669
        %v672 = vsel %vm670, %v669, %v667
        %v673 = vlaneseq
        %v674 = vshrl.u32 %v673, 7
        %v675 = vsub.s32 7, %v674
        %v676 = vrot.slane %v300, %v675
        %v677 = vlaneseq
        %v678 = vshrl.u32 %v677, 7
        %v679 = vsub.s32 7, %v678
        %v680 = vrot.slane %v301, %v679
        %v681 = vmul.f32 %v671, %v676
        %v682 = vmul.f32 %v672, %v680
        %683 = vset.pattern.permute.xlu0 7
        %684 = vperm.xlu0 %683, %v506
        %v685 = vpop.permute.xlu0 %684
        %v687 = vmul.f32 %v681, %v685
        %v688 = vmul.f32 %v682, %v685
        %v689 = vadd.f32 %v664, %v687
        %v690 = vadd.f32 %v665, %v688
        %691 = vrot.lane.b32.xlu0 %v504, 111
        %v692 = vpop.permute.xlu0 %691
        %693 = vrot.lane.b32.xlu0 %v505, 111
        %v694 = vpop.permute.xlu0 %693
        %vm695 = vcmp.lt.s32.totalorder %v512, 111
        %v696 = vsel %vm695, %v692, %v694
        %v697 = vsel %vm695, %v694, %v692
        %v698 = vlaneseq
        %v699 = vshrl.u32 %v698, 7
        %v700 = vsub.s32 0, %v699
        %v701 = vrot.slane %v302, %v700
        %v702 = vlaneseq
        %v703 = vshrl.u32 %v702, 7
        %v704 = vsub.s32 0, %v703
        %v705 = vrot.slane %v303, %v704
        %v706 = vmul.f32 %v696, %v701
        %v707 = vmul.f32 %v697, %v705
        %708 = vset.pattern.permute.xlu0 8
        %709 = vperm.xlu0 %708, %v506
        %v710 = vpop.permute.xlu0 %709
        %v712 = vmul.f32 %v706, %v710
        %v713 = vmul.f32 %v707, %v710
        %v714 = vadd.f32 %v689, %v712
        %v715 = vadd.f32 %v690, %v713
        %716 = vset.pattern.permute.xlu0 4
        %717 = vperm.xlu0 %716, %v299
        %v718 = vpop.permute.xlu0 %717
        %v720 = vadd.f32 %v714, %v718
        %v721 = vadd.f32 %v715, %v718
        %723 = vset.pattern.permute.xlu0 0
        %724 = vperm.xlu0 %723, %v306
        %v725 = vpop.permute.xlu0 %724
        %v727 = vmul.f32 %v725, %v381
        %v728 = vmul.f32 %v725, %v385
        %729 = vset.pattern.permute.xlu0 1
        %730 = vperm.xlu0 %729, %v306
        %v731 = vpop.permute.xlu0 %730
        %v733 = vmul.f32 %v731, %v395
        %v734 = vmul.f32 %v731, %v399
        %v735 = vadd.f32 %v727, %v733
        %v736 = vadd.f32 %v728, %v734
        %737 = vset.pattern.permute.xlu0 2
        %738 = vperm.xlu0 %737, %v306
        %v739 = vpop.permute.xlu0 %738
        %v741 = vmul.f32 %v739, %v411
        %v742 = vmul.f32 %v739, %v415
        %v743 = vadd.f32 %v735, %v741
        %v744 = vadd.f32 %v736, %v742
        %745 = vset.pattern.permute.xlu0 3
        %746 = vperm.xlu0 %745, %v306
        %v747 = vpop.permute.xlu0 %746
        %v749 = vmul.f32 %v747, %v427
        %v750 = vmul.f32 %v747, %v431
        %v751 = vadd.f32 %v743, %v749
        %v752 = vadd.f32 %v744, %v750
        %753 = vset.pattern.permute.xlu0 4
        %754 = vperm.xlu0 %753, %v306
        %v755 = vpop.permute.xlu0 %754
        %v757 = vmul.f32 %v755, %v443
        %v758 = vmul.f32 %v755, %v447
        %v759 = vadd.f32 %v751, %v757
        %v760 = vadd.f32 %v752, %v758
        %761 = vset.pattern.permute.xlu0 5
        %762 = vperm.xlu0 %761, %v306
        %v763 = vpop.permute.xlu0 %762
        %v765 = vmul.f32 %v763, %v459
        %v766 = vmul.f32 %v763, %v463
        %v767 = vadd.f32 %v759, %v765
        %v768 = vadd.f32 %v760, %v766
        %769 = vset.pattern.permute.xlu0 6
        %770 = vperm.xlu0 %769, %v306
        %v771 = vpop.permute.xlu0 %770
        %v773 = vmul.f32 %v771, %v475
        %v774 = vmul.f32 %v771, %v479
        %v775 = vadd.f32 %v767, %v773
        %v776 = vadd.f32 %v768, %v774
        %777 = vset.pattern.permute.xlu0 7
        %778 = vperm.xlu0 %777, %v306
        %v779 = vpop.permute.xlu0 %778
        %v781 = vmul.f32 %v779, %v491
        %v782 = vmul.f32 %v779, %v495
        %v783 = vadd.f32 %v775, %v781
        %v784 = vadd.f32 %v776, %v782
        %785 = vset.pattern.permute.xlu0 3
        %786 = vperm.xlu0 %785, %v299
        %v787 = vpop.permute.xlu0 %786
        %v789 = vadd.f32 %v783, %v787
        %v790 = vadd.f32 %v784, %v787
        %s791 = scalar_lea.vmem [#allocation8], 8
        %v792 = vld [vmem:[%s791] sm:$0xff]
        %793 = vrot.lane.b32.xlu0 %v789, 17
        %v794 = vpop.permute.xlu0 %793
        %795 = vrot.lane.b32.xlu0 %v790, 17
        %v796 = vpop.permute.xlu0 %795
        %v797 = vsel %vm513, %v794, %v796
        %v798 = vsel %vm513, %v796, %v794
        %v799 = vmul.f32 %v798, %v519
        %v800 = vmul.f32 %v797, %v523
        %802 = vset.pattern.permute.xlu0 0
        %803 = vperm.xlu0 %802, %v792
        %v804 = vpop.permute.xlu0 %803
        %v806 = vmul.f32 %v799, %v804
        %v807 = vmul.f32 %v800, %v804
        %808 = vrot.lane.b32.xlu0 %v789, 16
        %v809 = vpop.permute.xlu0 %808
        %810 = vrot.lane.b32.xlu0 %v790, 16
        %v811 = vpop.permute.xlu0 %810
        %v812 = vsel %vm537, %v809, %v811
        %v813 = vsel %vm537, %v811, %v809
        %v814 = vmul.f32 %v813, %v543
        %v815 = vmul.f32 %v812, %v547
        %816 = vset.pattern.permute.xlu0 1
        %817 = vperm.xlu0 %816, %v792
        %v818 = vpop.permute.xlu0 %817
        %v820 = vmul.f32 %v814, %v818
        %v821 = vmul.f32 %v815, %v818
        %v822 = vadd.f32 %v806, %v820
        %v823 = vadd.f32 %v807, %v821
        %824 = vrot.lane.b32.xlu0 %v789, 15
        %v825 = vpop.permute.xlu0 %824
        %826 = vrot.lane.b32.xlu0 %v790, 15
        %v827 = vpop.permute.xlu0 %826
        %v828 = vsel %vm562, %v825, %v827
        %v829 = vsel %vm562, %v827, %v825
        %v830 = vmul.f32 %v829, %v568
        %v831 = vmul.f32 %v828, %v572
        %832 = vset.pattern.permute.xlu0 2
        %833 = vperm.xlu0 %832, %v792
        %v834 = vpop.permute.xlu0 %833
        %v836 = vmul.f32 %v830, %v834
        %v837 = vmul.f32 %v831, %v834
        %v838 = vadd.f32 %v822, %v836
        %v839 = vadd.f32 %v823, %v837
        %840 = vrot.lane.b32.xlu0 %v789, 1
        %v841 = vpop.permute.xlu0 %840
        %842 = vrot.lane.b32.xlu0 %v790, 1
        %v843 = vpop.permute.xlu0 %842
        %v844 = vsel %vm587, %v841, %v843
        %v845 = vsel %vm587, %v843, %v841
        %v846 = vmul.f32 %v845, %v593
        %v847 = vmul.f32 %v844, %v597
        %848 = vset.pattern.permute.xlu0 3
        %849 = vperm.xlu0 %848, %v792
        %v850 = vpop.permute.xlu0 %849
        %v852 = vmul.f32 %v846, %v850
        %v853 = vmul.f32 %v847, %v850
        %v854 = vadd.f32 %v838, %v852
        %v855 = vadd.f32 %v839, %v853
        %856 = vset.pattern.permute.xlu0 4
        %857 = vperm.xlu0 %856, %v792
        %v858 = vpop.permute.xlu0 %857
        %v860 = vmul.f32 %v789, %v858
        %v861 = vmul.f32 %v790, %v858
        %v862 = vadd.f32 %v854, %v860
        %v863 = vadd.f32 %v855, %v861
        %864 = vrot.lane.b32.xlu0 %v789, 127
        %v865 = vpop.permute.xlu0 %864
        %866 = vrot.lane.b32.xlu0 %v790, 127
        %v867 = vpop.permute.xlu0 %866
        %v868 = vsel %vm620, %v865, %v867
        %v869 = vsel %vm620, %v867, %v865
        %v870 = vmul.f32 %v868, %v626
        %v871 = vmul.f32 %v869, %v630
        %872 = vset.pattern.permute.xlu0 5
        %873 = vperm.xlu0 %872, %v792
        %v874 = vpop.permute.xlu0 %873
        %v876 = vmul.f32 %v870, %v874
        %v877 = vmul.f32 %v871, %v874
        %v878 = vadd.f32 %v862, %v876
        %v879 = vadd.f32 %v863, %v877
        %880 = vrot.lane.b32.xlu0 %v789, 113
        %v881 = vpop.permute.xlu0 %880
        %882 = vrot.lane.b32.xlu0 %v790, 113
        %v883 = vpop.permute.xlu0 %882
        %v884 = vsel %vm645, %v881, %v883
        %v885 = vsel %vm645, %v883, %v881
        %v886 = vmul.f32 %v884, %v651
        %v887 = vmul.f32 %v885, %v655
        %888 = vset.pattern.permute.xlu0 6
        %889 = vperm.xlu0 %888, %v792
        %v890 = vpop.permute.xlu0 %889
        %v892 = vmul.f32 %v886, %v890
        %v893 = vmul.f32 %v887, %v890
        %v894 = vadd.f32 %v878, %v892
        %v895 = vadd.f32 %v879, %v893
        %896 = vrot.lane.b32.xlu0 %v789, 112
        %v897 = vpop.permute.xlu0 %896
        %898 = vrot.lane.b32.xlu0 %v790, 112
        %v899 = vpop.permute.xlu0 %898
        %v900 = vsel %vm670, %v897, %v899
        %v901 = vsel %vm670, %v899, %v897
        %v902 = vmul.f32 %v900, %v676
        %v903 = vmul.f32 %v901, %v680
        %904 = vset.pattern.permute.xlu0 7
        %905 = vperm.xlu0 %904, %v792
        %v906 = vpop.permute.xlu0 %905
        %v908 = vmul.f32 %v902, %v906
        %v909 = vmul.f32 %v903, %v906
        %v910 = vadd.f32 %v894, %v908
        %v911 = vadd.f32 %v895, %v909
        %912 = vrot.lane.b32.xlu0 %v789, 111
        %v913 = vpop.permute.xlu0 %912
        %914 = vrot.lane.b32.xlu0 %v790, 111
        %v915 = vpop.permute.xlu0 %914
        %v916 = vsel %vm695, %v913, %v915
        %v917 = vsel %vm695, %v915, %v913
        %v918 = vmul.f32 %v916, %v701
        %v919 = vmul.f32 %v917, %v705
        %920 = vset.pattern.permute.xlu0 8
        %921 = vperm.xlu0 %920, %v792
        %v922 = vpop.permute.xlu0 %921
        %v924 = vmul.f32 %v918, %v922
        %v925 = vmul.f32 %v919, %v922
        %v926 = vadd.f32 %v910, %v924
        %v927 = vadd.f32 %v911, %v925
        %928 = vset.pattern.permute.xlu0 5
        %929 = vperm.xlu0 %928, %v299
        %v930 = vpop.permute.xlu0 %929
        %v932 = vadd.f32 %v926, %v930
        %v933 = vadd.f32 %v927, %v930
        %v934 = vmul.f32 %v720, %v932
        %v935 = vmul.f32 %v721, %v933
        %v936 = vadd.f32 %v934, %v935
        %937 = vadd.xlane.f32.xlu0 %v936
        %v938 = vpop.xlane.xlu0 %937
        %v939 = vrcp.pop 256.0
        %v940 = vmul.f32 %v938, %v939
        %v941 = vlaneseq
        %v942 = vshrl.u32 %v941, 7
        %v943 = vsub.s32 0, %v942
        %v944 = vrot.slane %v940, %v943
        %v945 = vmul.f32 %v308, %v944
        %v946 = vlaneseq
        %v947 = vshrl.u32 %v946, 7
        %v948 = vsub.s32 1, %v947
        %v949 = vrot.slane %v940, %v948
        %v950 = vmul.f32 %v308, %v949
        %952 = vrot.lane.b32.xlu0 %v950, 127
        %v953 = vpop.permute.xlu0 %952
        %v955 = vadd.f32 %v945, %v953
        %v956 = vlaneseq
        %v957 = vshrl.u32 %v956, 7
        %v958 = vsub.s32 2, %v957
        %v959 = vrot.slane %v940, %v958
        %v960 = vmul.f32 %v308, %v959
        %962 = vrot.lane.b32.xlu0 %v960, 126
        %v963 = vpop.permute.xlu0 %962
        %v965 = vadd.f32 %v955, %v963
        %v966 = vlaneseq
        %v967 = vshrl.u32 %v966, 7
        %v968 = vsub.s32 3, %v967
        %v969 = vrot.slane %v940, %v968
        %v970 = vmul.f32 %v308, %v969
        %972 = vrot.lane.b32.xlu0 %v970, 125
        %v973 = vpop.permute.xlu0 %972
        %v975 = vadd.f32 %v965, %v973
        %v976 = vlaneseq
        %v977 = vshrl.u32 %v976, 7
        %v978 = vsub.s32 4, %v977
        %v979 = vrot.slane %v940, %v978
        %v980 = vmul.f32 %v308, %v979
        %982 = vrot.lane.b32.xlu0 %v980, 124
        %v983 = vpop.permute.xlu0 %982
        %v985 = vadd.f32 %v975, %v983
        %v986 = vlaneseq
        %v987 = vshrl.u32 %v986, 7
        %v988 = vsub.s32 5, %v987
        %v989 = vrot.slane %v940, %v988
        %v990 = vmul.f32 %v308, %v989
        %992 = vrot.lane.b32.xlu0 %v990, 123
        %v993 = vpop.permute.xlu0 %992
        %v995 = vadd.f32 %v985, %v993
        %v996 = vlaneseq
        %v997 = vshrl.u32 %v996, 7
        %v998 = vsub.s32 6, %v997
        %v999 = vrot.slane %v940, %v998
        %v1000 = vmul.f32 %v308, %v999
        %1002 = vrot.lane.b32.xlu0 %v1000, 122
        %v1003 = vpop.permute.xlu0 %1002
        %v1005 = vadd.f32 %v995, %v1003
        %v1006 = vlaneseq
        %v1007 = vshrl.u32 %v1006, 7
        %v1008 = vsub.s32 7, %v1007
        %v1009 = vrot.slane %v940, %v1008
        %v1010 = vmul.f32 %v308, %v1009
        %1012 = vrot.lane.b32.xlu0 %v1010, 121
        %v1013 = vpop.permute.xlu0 %1012
        %v1015 = vadd.f32 %v1005, %v1013
        %1016 = vrot.lane.b32.xlu0 %v299, 122
        %v1017 = vpop.permute.xlu0 %1016
        %v1019 = vadd.f32 %v1015, %v1017
        %1021 = vset.pattern.permute.xlu0 0
        %1022 = vperm.xlu0 %1021, %v1019
        %v1023 = vpop.permute.xlu0 %1022
        %v1025 = vmul.f32 %v934, %v1023
        %v1026 = vmul.f32 %v935, %v1023
        %1028 = vset.pattern.permute.xlu0 0
        %1029 = vperm.xlu0 %1028, %v310
        %v1030 = vpop.permute.xlu0 %1029
        %v1032 = vlaneseq
        %v1033 = vshrl.u32 %v1032, 7
        %v1034 = vsub.s32 0, %v1033
        %v1035 = vrot.slane %v1025, %v1034
        %v1036 = vlaneseq
        %v1037 = vshrl.u32 %v1036, 7
        %v1038 = vsub.s32 0, %v1037
        %v1039 = vrot.slane %v1026, %v1038
        %v1040 = vmul.f32 %v1030, %v1035
        %v1041 = vmul.f32 %v1030, %v1039
        %1042 = vset.pattern.permute.xlu0 1
        %1043 = vperm.xlu0 %1042, %v310
        %v1044 = vpop.permute.xlu0 %1043
        %v1046 = vlaneseq
        %v1047 = vshrl.u32 %v1046, 7
        %v1048 = vsub.s32 1, %v1047
        %v1049 = vrot.slane %v1025, %v1048
        %v1050 = vlaneseq
        %v1051 = vshrl.u32 %v1050, 7
        %v1052 = vsub.s32 1, %v1051
        %v1053 = vrot.slane %v1026, %v1052
        %v1054 = vmul.f32 %v1044, %v1049
        %v1055 = vmul.f32 %v1044, %v1053
        %v1056 = vadd.f32 %v1040, %v1054
        %v1057 = vadd.f32 %v1041, %v1055
        %1058 = vset.pattern.permute.xlu0 2
        %1059 = vperm.xlu0 %1058, %v310
        %v1060 = vpop.permute.xlu0 %1059
        %v1062 = vlaneseq
        %v1063 = vshrl.u32 %v1062, 7
        %v1064 = vsub.s32 2, %v1063
        %v1065 = vrot.slane %v1025, %v1064
        %v1066 = vlaneseq
        %v1067 = vshrl.u32 %v1066, 7
        %v1068 = vsub.s32 2, %v1067
        %v1069 = vrot.slane %v1026, %v1068
        %v1070 = vmul.f32 %v1060, %v1065
        %v1071 = vmul.f32 %v1060, %v1069
        %v1072 = vadd.f32 %v1056, %v1070
        %v1073 = vadd.f32 %v1057, %v1071
        %1074 = vset.pattern.permute.xlu0 3
        %1075 = vperm.xlu0 %1074, %v310
        %v1076 = vpop.permute.xlu0 %1075
        %v1078 = vlaneseq
        %v1079 = vshrl.u32 %v1078, 7
        %v1080 = vsub.s32 3, %v1079
        %v1081 = vrot.slane %v1025, %v1080
        %v1082 = vlaneseq
        %v1083 = vshrl.u32 %v1082, 7
        %v1084 = vsub.s32 3, %v1083
        %v1085 = vrot.slane %v1026, %v1084
        %v1086 = vmul.f32 %v1076, %v1081
        %v1087 = vmul.f32 %v1076, %v1085
        %v1088 = vadd.f32 %v1072, %v1086
        %v1089 = vadd.f32 %v1073, %v1087
        %1090 = vset.pattern.permute.xlu0 4
        %1091 = vperm.xlu0 %1090, %v310
        %v1092 = vpop.permute.xlu0 %1091
        %v1094 = vlaneseq
        %v1095 = vshrl.u32 %v1094, 7
        %v1096 = vsub.s32 4, %v1095
        %v1097 = vrot.slane %v1025, %v1096
        %v1098 = vlaneseq
        %v1099 = vshrl.u32 %v1098, 7
        %v1100 = vsub.s32 4, %v1099
        %v1101 = vrot.slane %v1026, %v1100
        %v1102 = vmul.f32 %v1092, %v1097
        %v1103 = vmul.f32 %v1092, %v1101
        %v1104 = vadd.f32 %v1088, %v1102
        %v1105 = vadd.f32 %v1089, %v1103
        %1106 = vset.pattern.permute.xlu0 5
        %1107 = vperm.xlu0 %1106, %v310
        %v1108 = vpop.permute.xlu0 %1107
        %v1110 = vlaneseq
        %v1111 = vshrl.u32 %v1110, 7
        %v1112 = vsub.s32 5, %v1111
        %v1113 = vrot.slane %v1025, %v1112
        %v1114 = vlaneseq
        %v1115 = vshrl.u32 %v1114, 7
        %v1116 = vsub.s32 5, %v1115
        %v1117 = vrot.slane %v1026, %v1116
        %v1118 = vmul.f32 %v1108, %v1113
        %v1119 = vmul.f32 %v1108, %v1117
        %v1120 = vadd.f32 %v1104, %v1118
        %v1121 = vadd.f32 %v1105, %v1119
        %1122 = vset.pattern.permute.xlu0 6
        %1123 = vperm.xlu0 %1122, %v310
        %v1124 = vpop.permute.xlu0 %1123
        %v1126 = vlaneseq
        %v1127 = vshrl.u32 %v1126, 7
        %v1128 = vsub.s32 6, %v1127
        %v1129 = vrot.slane %v1025, %v1128
        %v1130 = vlaneseq
        %v1131 = vshrl.u32 %v1130, 7
        %v1132 = vsub.s32 6, %v1131
        %v1133 = vrot.slane %v1026, %v1132
        %v1134 = vmul.f32 %v1124, %v1129
        %v1135 = vmul.f32 %v1124, %v1133
        %v1136 = vadd.f32 %v1120, %v1134
        %v1137 = vadd.f32 %v1121, %v1135
        %1138 = vset.pattern.permute.xlu0 7
        %1139 = vperm.xlu0 %1138, %v310
        %v1140 = vpop.permute.xlu0 %1139
        %v1142 = vlaneseq
        %v1143 = vshrl.u32 %v1142, 7
        %v1144 = vsub.s32 7, %v1143
        %v1145 = vrot.slane %v1025, %v1144
        %v1146 = vlaneseq
        %v1147 = vshrl.u32 %v1146, 7
        %v1148 = vsub.s32 7, %v1147
        %v1149 = vrot.slane %v1026, %v1148
        %v1150 = vmul.f32 %v1140, %v1145
        %v1151 = vmul.f32 %v1140, %v1149
        %v1152 = vadd.f32 %v1136, %v1150
        %v1153 = vadd.f32 %v1137, %v1151
        %1154 = vset.pattern.permute.xlu0 7
        %1155 = vperm.xlu0 %1154, %v299
        %v1156 = vpop.permute.xlu0 %1155
        %v1158 = vadd.f32 %v1152, %v1156
        %v1159 = vadd.f32 %v1153, %v1156
        %1160 = vset.pattern.permute.xlu0 8
        %1161 = vperm.xlu0 %1160, %v299
        %v1162 = vpop.permute.xlu0 %1161
        %v1164 = vmul.f32 %v1158, %v1162
        %v1165 = vmul.f32 %v1159, %v1162
        %v1166 = vadd.f32 %v297, %v1164
        %v1167 = vadd.f32 %v298, %v1165
        %v1168 = vrot.slane %v1166, 4
        %v1169 = vadd.f32 %v1166, %v1168
        %v1170 = vrot.slane %v1169, 2
        %v1171 = vadd.f32 %v1169, %v1170
        %v1172 = vrot.slane %v1171, 1
        %v1173 = vadd.f32 %v1171, %v1172
        %v1174 = vrot.slane %v1167, 4
        %v1175 = vadd.f32 %v1167, %v1174
        %v1176 = vrot.slane %v1175, 2
        %v1177 = vadd.f32 %v1175, %v1176
        %v1178 = vrot.slane %v1177, 1
        %v1179 = vadd.f32 %v1177, %v1178
        %v1180 = vmul.f32 %v1173, %v329
        %v1181 = vmul.f32 %v1179, %v329
        %v1182 = vmul.f32 %v1166, %v1166
        %v1183 = vmul.f32 %v1167, %v1167
        %v1184 = vrot.slane %v1182, 4
        %v1185 = vadd.f32 %v1182, %v1184
        %v1186 = vrot.slane %v1185, 2
        %v1187 = vadd.f32 %v1185, %v1186
        %v1188 = vrot.slane %v1187, 1
        %v1189 = vadd.f32 %v1187, %v1188
        %v1190 = vrot.slane %v1183, 4
        %v1191 = vadd.f32 %v1183, %v1190
        %v1192 = vrot.slane %v1191, 2
        %v1193 = vadd.f32 %v1191, %v1192
        %v1194 = vrot.slane %v1193, 1
        %v1195 = vadd.f32 %v1193, %v1194
        %v1196 = vmul.f32 %v1189, %v329
        %v1197 = vmul.f32 %v1195, %v329
        %v1198 = vmul.f32 %v1180, %v1180
        %v1199 = vmul.f32 %v1181, %v1181
        %v1200 = vsub.f32 %v1196, %v1198
        %v1201 = vsub.f32 %v1197, %v1199
        %v1202 = vadd.f32 %v1200, 1e-06
        %v1203 = vadd.f32 %v1201, 1e-06
        %v1204 = vrsqrt.pop %v1202
        %v1205 = vrsqrt.pop %v1203
        %v1206 = vsub.f32 %v1166, %v1180
        %v1207 = vsub.f32 %v1167, %v1181
        %v1208 = vmul.f32 %v1206, %v1204
        %v1209 = vmul.f32 %v1207, %v1205
        %1210 = vset.pattern.permute.xlu0 9
        %1211 = vperm.xlu0 %1210, %v299
        %v1212 = vpop.permute.xlu0 %1211
        %v1214 = vmul.f32 %v1208, %v1212
        %v1215 = vmul.f32 %v1209, %v1212
        %1216 = vset.pattern.permute.xlu0 10
        %1217 = vperm.xlu0 %1216, %v299
        %v1218 = vpop.permute.xlu0 %1217
        %v1220 = vadd.f32 %v1214, %v1218
        %v1221 = vadd.f32 %v1215, %v1218
        %1223 = vset.pattern.permute.xlu0 0
        %1224 = vperm.xlu0 %1223, %v312
        %v1225 = vpop.permute.xlu0 %1224
        %v1227 = vlaneseq
        %v1228 = vshrl.u32 %v1227, 7
        %v1229 = vsub.s32 0, %v1228
        %v1230 = vrot.slane %v1220, %v1229
        %v1231 = vlaneseq
        %v1232 = vshrl.u32 %v1231, 7
        %v1233 = vsub.s32 0, %v1232
        %v1234 = vrot.slane %v1221, %v1233
        %v1235 = vmul.f32 %v1225, %v1230
        %v1236 = vmul.f32 %v1225, %v1234
        %1237 = vset.pattern.permute.xlu0 1
        %1238 = vperm.xlu0 %1237, %v312
        %v1239 = vpop.permute.xlu0 %1238
        %v1241 = vlaneseq
        %v1242 = vshrl.u32 %v1241, 7
        %v1243 = vsub.s32 1, %v1242
        %v1244 = vrot.slane %v1220, %v1243
        %v1245 = vlaneseq
        %v1246 = vshrl.u32 %v1245, 7
        %v1247 = vsub.s32 1, %v1246
        %v1248 = vrot.slane %v1221, %v1247
        %v1249 = vmul.f32 %v1239, %v1244
        %v1250 = vmul.f32 %v1239, %v1248
        %v1251 = vadd.f32 %v1235, %v1249
        %v1252 = vadd.f32 %v1236, %v1250
        %1253 = vset.pattern.permute.xlu0 2
        %1254 = vperm.xlu0 %1253, %v312
        %v1255 = vpop.permute.xlu0 %1254
        %v1257 = vlaneseq
        %v1258 = vshrl.u32 %v1257, 7
        %v1259 = vsub.s32 2, %v1258
        %v1260 = vrot.slane %v1220, %v1259
        %v1261 = vlaneseq
        %v1262 = vshrl.u32 %v1261, 7
        %v1263 = vsub.s32 2, %v1262
        %v1264 = vrot.slane %v1221, %v1263
        %v1265 = vmul.f32 %v1255, %v1260
        %v1266 = vmul.f32 %v1255, %v1264
        %v1267 = vadd.f32 %v1251, %v1265
        %v1268 = vadd.f32 %v1252, %v1266
        %1269 = vset.pattern.permute.xlu0 3
        %1270 = vperm.xlu0 %1269, %v312
        %v1271 = vpop.permute.xlu0 %1270
        %v1273 = vlaneseq
        %v1274 = vshrl.u32 %v1273, 7
        %v1275 = vsub.s32 3, %v1274
        %v1276 = vrot.slane %v1220, %v1275
        %v1277 = vlaneseq
        %v1278 = vshrl.u32 %v1277, 7
        %v1279 = vsub.s32 3, %v1278
        %v1280 = vrot.slane %v1221, %v1279
        %v1281 = vmul.f32 %v1271, %v1276
        %v1282 = vmul.f32 %v1271, %v1280
        %v1283 = vadd.f32 %v1267, %v1281
        %v1284 = vadd.f32 %v1268, %v1282
        %1285 = vset.pattern.permute.xlu0 4
        %1286 = vperm.xlu0 %1285, %v312
        %v1287 = vpop.permute.xlu0 %1286
        %v1289 = vlaneseq
        %v1290 = vshrl.u32 %v1289, 7
        %v1291 = vsub.s32 4, %v1290
        %v1292 = vrot.slane %v1220, %v1291
        %v1293 = vlaneseq
        %v1294 = vshrl.u32 %v1293, 7
        %v1295 = vsub.s32 4, %v1294
        %v1296 = vrot.slane %v1221, %v1295
        %v1297 = vmul.f32 %v1287, %v1292
        %v1298 = vmul.f32 %v1287, %v1296
        %v1299 = vadd.f32 %v1283, %v1297
        %v1300 = vadd.f32 %v1284, %v1298
        %1301 = vset.pattern.permute.xlu0 5
        %1302 = vperm.xlu0 %1301, %v312
        %v1303 = vpop.permute.xlu0 %1302
        %v1305 = vlaneseq
        %v1306 = vshrl.u32 %v1305, 7
        %v1307 = vsub.s32 5, %v1306
        %v1308 = vrot.slane %v1220, %v1307
        %v1309 = vlaneseq
        %v1310 = vshrl.u32 %v1309, 7
        %v1311 = vsub.s32 5, %v1310
        %v1312 = vrot.slane %v1221, %v1311
        %v1313 = vmul.f32 %v1303, %v1308
        %v1314 = vmul.f32 %v1303, %v1312
        %v1315 = vadd.f32 %v1299, %v1313
        %v1316 = vadd.f32 %v1300, %v1314
        %1317 = vset.pattern.permute.xlu0 6
        %1318 = vperm.xlu0 %1317, %v312
        %v1319 = vpop.permute.xlu0 %1318
        %v1321 = vlaneseq
        %v1322 = vshrl.u32 %v1321, 7
        %v1323 = vsub.s32 6, %v1322
        %v1324 = vrot.slane %v1220, %v1323
        %v1325 = vlaneseq
        %v1326 = vshrl.u32 %v1325, 7
        %v1327 = vsub.s32 6, %v1326
        %v1328 = vrot.slane %v1221, %v1327
        %v1329 = vmul.f32 %v1319, %v1324
        %v1330 = vmul.f32 %v1319, %v1328
        %v1331 = vadd.f32 %v1315, %v1329
        %v1332 = vadd.f32 %v1316, %v1330
        %1333 = vset.pattern.permute.xlu0 7
        %1334 = vperm.xlu0 %1333, %v312
        %v1335 = vpop.permute.xlu0 %1334
        %v1337 = vlaneseq
        %v1338 = vshrl.u32 %v1337, 7
        %v1339 = vsub.s32 7, %v1338
        %v1340 = vrot.slane %v1220, %v1339
        %v1341 = vlaneseq
        %v1342 = vshrl.u32 %v1341, 7
        %v1343 = vsub.s32 7, %v1342
        %v1344 = vrot.slane %v1221, %v1343
        %v1345 = vmul.f32 %v1335, %v1340
        %v1346 = vmul.f32 %v1335, %v1344
        %v1347 = vadd.f32 %v1331, %v1345
        %v1348 = vadd.f32 %v1332, %v1346
        %1349 = vset.pattern.permute.xlu0 11
        %1350 = vperm.xlu0 %1349, %v299
        %v1351 = vpop.permute.xlu0 %1350
        %v1353 = vadd.f32 %v1347, %v1351
        %v1354 = vadd.f32 %v1348, %v1351
        %1356 = vset.pattern.permute.xlu0 0
        %1357 = vperm.xlu0 %1356, %v314
        %v1358 = vpop.permute.xlu0 %1357
        %v1360 = vmul.f32 %v1358, %v1230
        %v1361 = vmul.f32 %v1358, %v1234
        %1362 = vset.pattern.permute.xlu0 1
        %1363 = vperm.xlu0 %1362, %v314
        %v1364 = vpop.permute.xlu0 %1363
        %v1366 = vmul.f32 %v1364, %v1244
        %v1367 = vmul.f32 %v1364, %v1248
        %v1368 = vadd.f32 %v1360, %v1366
        %v1369 = vadd.f32 %v1361, %v1367
        %1370 = vset.pattern.permute.xlu0 2
        %1371 = vperm.xlu0 %1370, %v314
        %v1372 = vpop.permute.xlu0 %1371
        %v1374 = vmul.f32 %v1372, %v1260
        %v1375 = vmul.f32 %v1372, %v1264
        %v1376 = vadd.f32 %v1368, %v1374
        %v1377 = vadd.f32 %v1369, %v1375
        %1378 = vset.pattern.permute.xlu0 3
        %1379 = vperm.xlu0 %1378, %v314
        %v1380 = vpop.permute.xlu0 %1379
        %v1382 = vmul.f32 %v1380, %v1276
        %v1383 = vmul.f32 %v1380, %v1280
        %v1384 = vadd.f32 %v1376, %v1382
        %v1385 = vadd.f32 %v1377, %v1383
        %1386 = vset.pattern.permute.xlu0 4
        %1387 = vperm.xlu0 %1386, %v314
        %v1388 = vpop.permute.xlu0 %1387
        %v1390 = vmul.f32 %v1388, %v1292
        %v1391 = vmul.f32 %v1388, %v1296
        %v1392 = vadd.f32 %v1384, %v1390
        %v1393 = vadd.f32 %v1385, %v1391
        %1394 = vset.pattern.permute.xlu0 5
        %1395 = vperm.xlu0 %1394, %v314
        %v1396 = vpop.permute.xlu0 %1395
        %v1398 = vmul.f32 %v1396, %v1308
        %v1399 = vmul.f32 %v1396, %v1312
        %v1400 = vadd.f32 %v1392, %v1398
        %v1401 = vadd.f32 %v1393, %v1399
        %1402 = vset.pattern.permute.xlu0 6
        %1403 = vperm.xlu0 %1402, %v314
        %v1404 = vpop.permute.xlu0 %1403
        %v1406 = vmul.f32 %v1404, %v1324
        %v1407 = vmul.f32 %v1404, %v1328
        %v1408 = vadd.f32 %v1400, %v1406
        %v1409 = vadd.f32 %v1401, %v1407
        %1410 = vset.pattern.permute.xlu0 7
        %1411 = vperm.xlu0 %1410, %v314
        %v1412 = vpop.permute.xlu0 %1411
        %v1414 = vmul.f32 %v1412, %v1340
        %v1415 = vmul.f32 %v1412, %v1344
        %v1416 = vadd.f32 %v1408, %v1414
        %v1417 = vadd.f32 %v1409, %v1415
        %1418 = vset.pattern.permute.xlu0 12
        %1419 = vperm.xlu0 %1418, %v299
        %v1420 = vpop.permute.xlu0 %1419
        %v1422 = vadd.f32 %v1416, %v1420
        %v1423 = vadd.f32 %v1417, %v1420
        %v1424 = vmul.f32 %v1353, %v1422
        %v1425 = vmul.f32 %v1354, %v1423
        %1427 = vset.pattern.permute.xlu0 0
        %1428 = vperm.xlu0 %1427, %v316
        %v1429 = vpop.permute.xlu0 %1428
        %v1431 = vlaneseq
        %v1432 = vshrl.u32 %v1431, 7
        %v1433 = vsub.s32 0, %v1432
        %v1434 = vrot.slane %v1424, %v1433
        %v1435 = vlaneseq
        %v1436 = vshrl.u32 %v1435, 7
        %v1437 = vsub.s32 0, %v1436
        %v1438 = vrot.slane %v1425, %v1437
        %v1439 = vmul.f32 %v1429, %v1434
        %v1440 = vmul.f32 %v1429, %v1438
        %1441 = vset.pattern.permute.xlu0 1
        %1442 = vperm.xlu0 %1441, %v316
        %v1443 = vpop.permute.xlu0 %1442
        %v1445 = vlaneseq
        %v1446 = vshrl.u32 %v1445, 7
        %v1447 = vsub.s32 1, %v1446
        %v1448 = vrot.slane %v1424, %v1447
        %v1449 = vlaneseq
        %v1450 = vshrl.u32 %v1449, 7
        %v1451 = vsub.s32 1, %v1450
        %v1452 = vrot.slane %v1425, %v1451
        %v1453 = vmul.f32 %v1443, %v1448
        %v1454 = vmul.f32 %v1443, %v1452
        %v1455 = vadd.f32 %v1439, %v1453
        %v1456 = vadd.f32 %v1440, %v1454
        %1457 = vset.pattern.permute.xlu0 2
        %1458 = vperm.xlu0 %1457, %v316
        %v1459 = vpop.permute.xlu0 %1458
        %v1461 = vlaneseq
        %v1462 = vshrl.u32 %v1461, 7
        %v1463 = vsub.s32 2, %v1462
        %v1464 = vrot.slane %v1424, %v1463
        %v1465 = vlaneseq
        %v1466 = vshrl.u32 %v1465, 7
        %v1467 = vsub.s32 2, %v1466
        %v1468 = vrot.slane %v1425, %v1467
        %v1469 = vmul.f32 %v1459, %v1464
        %v1470 = vmul.f32 %v1459, %v1468
        %v1471 = vadd.f32 %v1455, %v1469
        %v1472 = vadd.f32 %v1456, %v1470
        %1473 = vset.pattern.permute.xlu0 3
        %1474 = vperm.xlu0 %1473, %v316
        %v1475 = vpop.permute.xlu0 %1474
        %v1477 = vlaneseq
        %v1478 = vshrl.u32 %v1477, 7
        %v1479 = vsub.s32 3, %v1478
        %v1480 = vrot.slane %v1424, %v1479
        %v1481 = vlaneseq
        %v1482 = vshrl.u32 %v1481, 7
        %v1483 = vsub.s32 3, %v1482
        %v1484 = vrot.slane %v1425, %v1483
        %v1485 = vmul.f32 %v1475, %v1480
        %v1486 = vmul.f32 %v1475, %v1484
        %v1487 = vadd.f32 %v1471, %v1485
        %v1488 = vadd.f32 %v1472, %v1486
        %1489 = vset.pattern.permute.xlu0 4
        %1490 = vperm.xlu0 %1489, %v316
        %v1491 = vpop.permute.xlu0 %1490
        %v1493 = vlaneseq
        %v1494 = vshrl.u32 %v1493, 7
        %v1495 = vsub.s32 4, %v1494
        %v1496 = vrot.slane %v1424, %v1495
        %v1497 = vlaneseq
        %v1498 = vshrl.u32 %v1497, 7
        %v1499 = vsub.s32 4, %v1498
        %v1500 = vrot.slane %v1425, %v1499
        %v1501 = vmul.f32 %v1491, %v1496
        %v1502 = vmul.f32 %v1491, %v1500
        %v1503 = vadd.f32 %v1487, %v1501
        %v1504 = vadd.f32 %v1488, %v1502
        %1505 = vset.pattern.permute.xlu0 5
        %1506 = vperm.xlu0 %1505, %v316
        %v1507 = vpop.permute.xlu0 %1506
        %v1509 = vlaneseq
        %v1510 = vshrl.u32 %v1509, 7
        %v1511 = vsub.s32 5, %v1510
        %v1512 = vrot.slane %v1424, %v1511
        %v1513 = vlaneseq
        %v1514 = vshrl.u32 %v1513, 7
        %v1515 = vsub.s32 5, %v1514
        %v1516 = vrot.slane %v1425, %v1515
        %v1517 = vmul.f32 %v1507, %v1512
        %v1518 = vmul.f32 %v1507, %v1516
        %v1519 = vadd.f32 %v1503, %v1517
        %v1520 = vadd.f32 %v1504, %v1518
        %1521 = vset.pattern.permute.xlu0 6
        %1522 = vperm.xlu0 %1521, %v316
        %v1523 = vpop.permute.xlu0 %1522
        %v1525 = vlaneseq
        %v1526 = vshrl.u32 %v1525, 7
        %v1527 = vsub.s32 6, %v1526
        %v1528 = vrot.slane %v1424, %v1527
        %v1529 = vlaneseq
        %v1530 = vshrl.u32 %v1529, 7
        %v1531 = vsub.s32 6, %v1530
        %v1532 = vrot.slane %v1425, %v1531
        %v1533 = vmul.f32 %v1523, %v1528
        %v1534 = vmul.f32 %v1523, %v1532
        %v1535 = vadd.f32 %v1519, %v1533
        %v1536 = vadd.f32 %v1520, %v1534
        %1537 = vset.pattern.permute.xlu0 7
        %1538 = vperm.xlu0 %1537, %v316
        %v1539 = vpop.permute.xlu0 %1538
        %v1541 = vlaneseq
        %v1542 = vshrl.u32 %v1541, 7
        %v1543 = vsub.s32 7, %v1542
        %v1544 = vrot.slane %v1424, %v1543
        %v1545 = vlaneseq
        %v1546 = vshrl.u32 %v1545, 7
        %v1547 = vsub.s32 7, %v1546
        %v1548 = vrot.slane %v1425, %v1547
        %v1549 = vmul.f32 %v1539, %v1544
        %v1550 = vmul.f32 %v1539, %v1548
        %v1551 = vadd.f32 %v1535, %v1549
        %v1552 = vadd.f32 %v1536, %v1550
        %1553 = vset.pattern.permute.xlu0 13
        %1554 = vperm.xlu0 %1553, %v299
        %v1555 = vpop.permute.xlu0 %1554
        %v1557 = vadd.f32 %v1551, %v1555
        %v1558 = vadd.f32 %v1552, %v1555
        %1559 = vset.pattern.permute.xlu0 14
        %1560 = vperm.xlu0 %1559, %v299
        %v1561 = vpop.permute.xlu0 %1560
        %v1563 = vmul.f32 %v1557, %v1561
        %v1564 = vmul.f32 %v1558, %v1561
        %v1565 = vadd.f32 %v1166, %v1563
        %v1566 = vadd.f32 %v1167, %v1564
        %1567 = vst [vmem:[%s296] sm:$0xff] %v1565
        %1568 = vst [vmem:[%s296 + $0x8] sm:$0xff] %v1566
        %s1569 = sand.u32 %s142, 1
        %s1570 = scalar_lea.sflag [#allocation4], %s1569
        %s1571 = sand.u32 %s142, 1
        %s1572 = smul.addr %s1571, 16
        %s1573 = scalar_lea.vmem [#allocation11], %s1572
        // Predicated region
        $region61: #{tpu_custom_call.1} parent=39 // pred_check
          %p1574 = pneg %p152
        $region62: #{tpu_custom_call.1} parent=39 // pred_check_branch
          %1576 = sbr.rel (%p1574) target = $region64
        $region63: #{tpu_custom_call.1} parent=39 // pred_region
          %s1578 = ssub.s32 256, 256
          %1579 = vsyncadd %s1570, %s1578
          %s1580 = smul.addr %s24, 2
          %s1581 = smul.addr %s1580, 128
          %s1582 = scalar_lea.hbm %s5, %s1581
          %s1584 = sshll.u32 %s1573, 4
          %s1585 = int_to_ptr.vmem [resolvable:$true] %s1584
          %1587 = dma.vmem_to_hbm [thread:$0]  %s1585, 256, %s1582, %s1570
        $region64: #{tpu_custom_call.1} parent=39 // pred_fallthru
          _
      $region40: #{tpu_custom_call.1} parent=5 // pred_fallthru
        _
      %p1588 = scmp.le.s32.totalorder 2, %s19
      // Predicated region
      $region65: #{tpu_custom_call.1} parent=5 // pred_check
        %p1589 = pneg %p1588
      $region66: #{tpu_custom_call.1} parent=5 // pred_check_branch
        %1591 = sbr.rel (%p1589) target = $region68
      $region67: #{tpu_custom_call.1} parent=5 // pred_region
        %s1592 = ssub.s32 %s19, 2
        // Predicated region
        $region69: #{tpu_custom_call.1} parent=67 // pred_check
          %p1593 = pneg %p158
        $region70: #{tpu_custom_call.1} parent=67 // pred_check_branch
          %1595 = sbr.rel (%p1593) target = $region72
        $region71: #{tpu_custom_call.1} parent=67 // pred_region
          %s1596 = sand.u32 %s143, 1
          %s1597 = scalar_lea.sflag [#allocation4], %s1596
          %s1598 = sand.u32 %s143, 1
          %s1599 = smul.addr %s1598, 16
          %s1600 = scalar_lea.vmem [#allocation11], %s1599
          %1601 = dma.done %s1597, 256
        $region72: #{tpu_custom_call.1} parent=67 // pred_fallthru
          _
      $region68: #{tpu_custom_call.1} parent=5 // pred_fallthru
        _
    $region6: #{tpu_custom_call.1} parent=1 // loop_footer
      %s23 = sadd.s32 1, %s19
    $region7: #{tpu_custom_call.1} parent=1 // loop_footer_branch
      %18 = sbr.rel target = $region3
    $region8: #{tpu_custom_call.1} parent=1 // loop_exit
      _
    %1602 = vsyncpa [#allocation3], 1
    %s1603 = scalar_lea.sflag [#allocation3], 1
    %1604 = vsyncpa %s1603, 1
    %1605 = vsyncpa [#allocation6], 1
    %1606 = vsyncpa [#allocation9], 1
    %1607 = vsyncpa [#allocation4], 1
    %s1608 = scalar_lea.sflag [#allocation4], 1
    %1609 = vsyncpa %s1608, 1

</llo_original>
